<compile_context>
chip_gen: v7x
topology: tpu7x:2x2x1
jax: 0.10.0
libtpu: 0.0.40
codegen_flags: <defaults>
</compile_context>

<pallas_src>
import functools

import jax
import jax.numpy as jnp
from jax import lax
from jax.experimental import pallas as pl
from jax.experimental.pallas import tpu as pltpu

# ----------------- FLAGS stand-ins (deterministic) ----------------------
FEAT_SEMAN = 32          # FLAGS.feat_seman
HIDDEN = 64              # point-feature width
N_PTS = 128              # points sampled from the back-projected cloud
N_PRIOR = 128            # shape-prior point count
DROP_SEMAN_PROB = 0.0    # FLAGS.drop_seman_prob -> 0 => never drop (deterministic)
# FLAGS.use_seman_feat = True, encoder_input_form = 'rgb',
# FLAGS.sample_method = 'basic', FLAGS.use_point_conf_for_vote = True

# pose-head layout: [green 3 | red 3 | f_green 1 | f_red 1 | T 3 | s_delta 3]
P_HEAD = 16                       # 14 used + 2 pad rows
P_TOT = P_HEAD + HIDDEN           # rows 0:14 pose head, 16:80 deform projection

# packed-slab row offsets -------------------------------------------------
_WA_WSE = 0                       # (F, 3)  seman 1x1 conv
_WA_W1PC = FEAT_SEMAN             # (H, 3)  trunk layer-1, PC part
_WA_WD1A = FEAT_SEMAN + HIDDEN    # (H, 3)  deform layer-1, prior part
_WA_ROWS = FEAT_SEMAN + 2 * HIDDEN            # 160

_WB_W2 = 0                        # (H, H)  trunk layer-2
_WB_WHD = HIDDEN                  # (80, H) fused [pose head | deform proj]
_WB_WD2 = HIDDEN + P_TOT          # (3, H)  deform output layer
_WB_ROWS = HIDDEN + P_TOT + 8                 # 152 (5 pad rows)

_B_BSE = 0
_B_B1 = FEAT_SEMAN
_B_B2 = FEAT_SEMAN + HIDDEN
_B_BHD = FEAT_SEMAN + 2 * HIDDEN              # 160  (rows 0:14 bh, 16:80 bd1)
_B_BD2 = _B_BHD + P_TOT                       # 240
_B_ROWS = _B_BD2 + 8                          # 248 (5 pad rows)

# VMEM budget: 32 MiB is the scoped default on v6e/v7x (v7x has 64 MiB
# physical per TC); block footprints below are capped well under it.
_VMEM_LIMIT_BYTES = 32 * 1024 * 1024
_MASK_TILE_ROWS_CAP = 1024        # rows of 128 lanes -> 128K lanes, ~5 MiB dbl-buffered


# =================== Kernel 1: object-mask head over the full image =====
def _mask_kernel(dwb_ref, rgb_ref, mask_ref):
    # dwb_ref (SMEM, f32[4]) = [w1-w0 per rgb channel, b1-b0]
    # rgb_ref:  (1, 3, S, 128) channels-first, sublane-dense tile
    # mask_ref: (1, 2, S, 128)
    x = rgb_ref[0]                                   # (3, S, 128)
    r = x[0:1, :, :]
    g = x[1:2, :, :]
    b = x[2:3, :, :]
    d = dwb_ref[0] * r + dwb_ref[1] * g + dwb_ref[2] * b + dwb_ref[3]
    # softmax over 2 classes == [1 - sigmoid(l1-l0), sigmoid(l1-l0)]
    p1 = pl.reciprocal(1.0 + jnp.exp(-d), approx=True)   # exp + recip on the EUP
    mask_ref[0, 0:1, :, :] = 1.0 - p1
    mask_ref[0, 1:2, :, :] = p1


def _pick_rows_tile(s_total, cap=_MASK_TILE_ROWS_CAP):
    # largest multiple of 8 that divides s_total and is <= cap (s_total is a
    # multiple of 8 because the wrapper pads HW to a multiple of 1024).
    if s_total <= cap:
        return s_total
    best = 8
    t = 8
    limit = min(s_total, cap)
    while t <= limit:
        if s_total % t == 0:
            best = t
        t += 8
    return best


def obj_mask_head(rgb_rows, dwb):
    # rgb_rows: (B, 3, S_total, 128) float32
    B, C, S_total, _ = rgb_rows.shape
    s_blk = _pick_rows_tile(S_total)
    return pl.pallas_call(
        _mask_kernel,
        out_shape=jax.ShapeDtypeStruct((B, 2, S_total, 128), jnp.float32),
        grid=(B, S_total // s_blk),
        in_specs=[pl.BlockSpec(memory_space=pltpu.MemorySpace.SMEM),
                  pl.BlockSpec((1, C, s_blk, 128), lambda b, s: (b, 0, s, 0))],
        out_specs=pl.BlockSpec((1, 2, s_blk, 128), lambda b, s: (b, 0, s, 0)),
        compiler_params=pltpu.CompilerParams(
            dimension_semantics=("parallel", "parallel"),
            vmem_limit_bytes=_VMEM_LIMIT_BYTES),
    )(dwb, rgb_rows)


# =================== Kernel 2: fused point path ==========================
# seman features @ sampled pixels + depth back-projection + PointNet trunk +
# pose heads + deformation field (+ shape_prior add), batch-folded and
# lane-dense, all in one pallas_call.
def _point_pose_kernel(pts_ref, prior_ref, wA_ref, w1se_ref, wB_ref, bias_ref,
                       pose_ref, recon_ref, *, bb, n_pts, n_prior):
    F, H = FEAT_SEMAN, HIDDEN
    x = pts_ref[0]                       # (8, bb*n_pts) rows: r,g,b,z,xn,yn,0,0
    r = x[0:1, :]
    g_c = x[1:2, :]
    b_c = x[2:3, :]
    z = x[3:4, :]
    xn = x[4:5, :]
    yn = x[5:6, :]

    wse_T = wA_ref[_WA_WSE:_WA_WSE + F, :]          # (F, 3)
    w1pc_T = wA_ref[_WA_W1PC:_WA_W1PC + H, :]       # (H, 3)
    wd1a_T = wA_ref[_WA_WD1A:_WA_WD1A + H, :]       # (H, 3)
    bse = bias_ref[_B_BSE:_B_BSE + F, :]            # (F, 1)
    b1 = bias_ref[_B_B1:_B_B1 + H, :]
    b2 = bias_ref[_B_B2:_B_B2 + H, :]
    bhd = bias_ref[_B_BHD:_B_BHD + P_TOT, :]        # (80, 1): rows 0:14 bh, 16:80 bd1
    bd2 = bias_ref[_B_BD2:_B_BD2 + 3, :]            # (3, 1)

    # ---- semantic 1x1-conv features at sampled pixels (rank-1 on the VPU)
    seman = wse_T[:, 0:1] * r + wse_T[:, 1:2] * g_c + wse_T[:, 2:3] * b_c + bse  # (F, L)

    # ---- depth back-projection: xn = (u-cx)/fx, yn = (v-cy)/fy precomputed
    pc_x = xn * z
    pc_y = yn * z
    # TODO(synk): PC.detach() (stop_gradient) is a forward no-op; omitted here.

    # ---- PointNet trunk: lane-dense (H, bb*N) MXU matmuls
    h1 = jnp.maximum(
        w1pc_T[:, 0:1] * pc_x + w1pc_T[:, 1:2] * pc_y + w1pc_T[:, 2:3] * z
        + jnp.dot(w1se_ref[...], seman, preferred_element_type=jnp.float32)
        + b1, 0.0)                                                            # (H, L)
    h2 = jnp.maximum(
        jnp.dot(wB_ref[_WB_W2:_WB_W2 + H, :], h1,
                preferred_element_type=jnp.float32) + b2, 0.0)                # (H, L)

    # ---- per-item global max-pool (each item owns one 128-lane segment)
    gcols = [jnp.max(h2[:, i * n_pts:(i + 1) * n_pts], axis=-1, keepdims=True)
             for i in range(bb)]
    gfeat = gcols[0] if bb == 1 else jnp.concatenate(gcols, axis=-1)          # (H, bb)

    # ---- fused pose-head + deform-conditioning matmul: one (80,H)@(H,bb) push
    combined = jnp.dot(wB_ref[_WB_WHD:_WB_WHD + P_TOT, :], gfeat,
                       preferred_element_type=jnp.float32) + bhd              # (80, bb)

    # ---- pose head (columns = batch items)
    raw = combined[0:P_HEAD, :]                                               # (16, bb)
    green = raw[0:3, :]
    red = raw[3:6, :]
    inv_g = lax.rsqrt(jnp.sum(green * green, axis=0, keepdims=True) + 1e-8)
    inv_r = lax.rsqrt(jnp.sum(red * red, axis=0, keepdims=True) + 1e-8)
    rowi = lax.broadcasted_iota(jnp.int32, raw.shape, 0)
    scale = jnp.where(rowi < 3, inv_g, jnp.where(rowi < 6, inv_r, 1.0))
    sig = pl.reciprocal(1.0 + jnp.exp(-raw), approx=True)
    # rows 0-5 normalized, 6-7 sigmoid, 8-13 identity, 14-15 pad (zeros)
    pose_ref[0] = jnp.where((rowi >= 6) & (rowi < 8), sig, raw * scale)

    # ---- deformation field MLP on the shape prior, conditioned on gfeat
    prior = prior_ref[0]                                                      # (3, Lp)
    gp_cols = combined[P_HEAD:P_TOT, :]                                       # (H, bb), bd1 folded in
    if bb == 1:
        gp = gp_cols
    else:
        gp = jnp.concatenate(
            [jnp.broadcast_to(gp_cols[:, i:i + 1], (H, n_prior)) for i in range(bb)],
            axis=-1)                                                          # (H, Lp)
    dh = jnp.maximum(
        wd1a_T[:, 0:1] * prior[0:1, :] + wd1a_T[:, 1:2] * prior[1:2, :]
        + wd1a_T[:, 2:3] * prior[2:3, :] + gp, 0.0)                           # (H, Lp)
    deform = jnp.dot(wB_ref[_WB_WD2:_WB_WD2 + 3, :], dh,
                     preferred_element_type=jnp.float32) + bd2                # (3, Lp)
    recon_ref[0] = prior + deform                    # recon_model = prior + deform


def point_posenet(pts_flat, prior_flat, wA, w1se_T, wB, bias, *, bb, n_pts, n_prior):
    G, _, L = pts_flat.shape
    Lp = prior_flat.shape[2]
    kern = functools.partial(_point_pose_kernel, bb=bb, n_pts=n_pts, n_prior=n_prior)
    return pl.pallas_call(
        kern,
        out_shape=(jax.ShapeDtypeStruct((G, P_HEAD, bb), jnp.float32),
                   jax.ShapeDtypeStruct((G, 3, Lp), jnp.float32)),
        grid=(G,),
        in_specs=[pl.BlockSpec((1, 8, L), lambda g: (g, 0, 0)),
                  pl.BlockSpec((1, 3, Lp), lambda g: (g, 0, 0)),
                  pl.BlockSpec(wA.shape, lambda g: (0, 0)),
                  pl.BlockSpec(w1se_T.shape, lambda g: (0, 0)),
                  pl.BlockSpec(wB.shape, lambda g: (0, 0)),
                  pl.BlockSpec(bias.shape, lambda g: (0, 0))],
        out_specs=(pl.BlockSpec((1, P_HEAD, bb), lambda g: (g, 0, 0)),
                   pl.BlockSpec((1, 3, Lp), lambda g: (g, 0, 0))),
        compiler_params=pltpu.CompilerParams(
            dimension_semantics=("parallel",),
            vmem_limit_bytes=_VMEM_LIMIT_BYTES),
    )(pts_flat, prior_flat, wA, w1se_T, wB, bias)


def _pick_bb(batch):
    # fold up to 4 items per grid step (keeps >=2 steps for larger batches)
    for d in (4, 2, 1):
        if batch % d == 0:
            return d
    return 1


def _pack_weights(p):
    F, H = FEAT_SEMAN, HIDDEN
    f32 = jnp.float32
    # rank-1 (·,3) weights, transposed
    wA = jnp.concatenate([p["wse"].T, p["w1pc"].T, p["wd1a"].T], axis=0).astype(f32)
    # fused [pose head | deform projection] matrix (80, H)
    whd_T = jnp.concatenate(
        [p["wh"].T, jnp.zeros((P_HEAD - 14, H), f32), p["wd1b"].T], axis=0)
    wB = jnp.concatenate(
        [p["w2"].T, whd_T, p["wd2"].T, jnp.zeros((_WB_ROWS - _WB_WD2 - 3, H), f32)],
        axis=0).astype(f32)
    w1se_T = p["w1se"].T.astype(f32)                       # (H, F)
    bhd = jnp.concatenate(
        [p["bh"].T, jnp.zeros((P_HEAD - 14, 1), f32), p["bd1"].T], axis=0)
    bias = jnp.concatenate(
        [p["bse"].T, p["b1"].T, p["b2"].T, bhd, p["bd2"].T,
         jnp.zeros((_B_ROWS - _B_BD2 - 3, 1), f32)], axis=0).astype(f32)
    return wA, w1se_T, wB, bias


# =================== parameters (deterministic, synthetic) ==============
def init_params(key):
    ks = jax.random.split(key, 16)
    n = lambda k, s: 0.1 * jax.random.normal(k, s, dtype=jnp.float32)
    return {
        # PSPNet stub (1x1 conv): seman features + 2-class mask head
        "wse": n(ks[0], (3, FEAT_SEMAN)), "bse": n(ks[1], (1, FEAT_SEMAN)),
        "wm": n(ks[2], (3, 2)), "bm": n(ks[3], (1, 2)),
        # PoseNet9D trunk (first layer split: PC part | seman part)
        "w1pc": n(ks[4], (3, HIDDEN)), "w1se": n(ks[5], (FEAT_SEMAN, HIDDEN)),
        "b1": n(ks[6], (1, HIDDEN)),
        "w2": n(ks[7], (HIDDEN, HIDDEN)), "b2": n(ks[8], (1, HIDDEN)),
        # heads: [green 3 | red 3 | f_green 1 | f_red 1 | T 3 | s 3] = 14
        "wh": n(ks[9], (HIDDEN, 14)), "bh": n(ks[10], (1, 14)),
        # deformation-field MLP
        "wd1a": n(ks[11], (3, HIDDEN)), "wd1b": n(ks[12], (HIDDEN, HIDDEN)),
        "bd1": jnp.zeros((1, HIDDEN), jnp.float32),
        "wd2": n(ks[13], (HIDDEN, 3)),
        "bd2": jnp.zeros((1, 3), jnp.float32),
    }


# =================== SelfSketchPoseNet.forward ==========================
@jax.jit
def self_sketch_pose_net_forward(params, depth, obj_id, camK, mean_shape,
                                 rgb=None, shape_prior=None, def_mask=None,
                                 gt_2D=None, depth_normalize=None):
    # TODO(synk): obj_id / def_mask / gt_2D / depth_normalize and the random
    # `sketch` tensor feed only the undefined submodules (category-conditioned
    # FCs, sketch-guided sampling); unused by this deterministic stub.
    # TODO(synk): the data-dependent NaN early-exits of the original forward
    # are device->host syncs; omitted so the whole forward stays jittable.
    del obj_id, def_mask, gt_2D, depth_normalize

    output_dict = {}
    B, _, H, W = depth.shape
    HW = H * W
    assert HW >= N_PTS, "basic sampling requires H*W >= N_PTS"

    rgb_cf = rgb.reshape(B, 3, HW).astype(jnp.float32)          # channels-first

    # ---- object-mask head over the full image (sublane-dense tiles) --------
    wm, bm = params["wm"], params["bm"]
    dwb = jnp.concatenate([wm[:, 1] - wm[:, 0], bm[:, 1] - bm[:, 0]], axis=0)
    pad = (-HW) % 1024                                          # -> S_total % 8 == 0
    rgb_pad = jnp.pad(rgb_cf, ((0, 0), (0, 0), (0, pad))) if pad else rgb_cf
    hwp = HW + pad
    rgb_rows = rgb_pad.reshape(B, 3, hwp // 128, 128)
    mask_rows = obj_mask_head(rgb_rows, dwb)                    # (B, 2, S, 128)
    mask_cf = mask_rows.reshape(B, 2, hwp)[:, :, :HW]
    output_dict["mask"] = mask_cf.reshape(B, 2, H, W)           # softmax probs
    # TODO(synk): optionally emit the mask in bf16 on v5e to halve HBM writes.

    # ---- basic point sampling via strided slices (no XLA gather) ------------
    stride = HW // N_PTS
    idx = jnp.arange(N_PTS, dtype=jnp.int32) * stride
    rgb_pts = rgb_cf[:, :, :N_PTS * stride:stride]              # (B, 3, N_PTS)
    z_pts = depth.reshape(B, 1, HW)[:, :, :N_PTS * stride:stride].astype(jnp.float32)
    u = (idx % W).astype(jnp.float32)
    v = (idx // W).astype(jnp.float32)
    fx, fy = camK[:, 0, 0], camK[:, 1, 1]
    cx, cy = camK[:, 0, 2], camK[:, 1, 2]
    xn = ((u[None, :] - cx[:, None]) / fx[:, None])[:, None, :]  # (B, 1, N_PTS)
    yn = ((v[None, :] - cy[:, None]) / fy[:, None])[:, None, :]
    pts_cf = jnp.concatenate(
        [rgb_pts, z_pts, xn, yn, jnp.zeros((B, 2, N_PTS), jnp.float32)], axis=1)
    # drop_seman_prob == 0.0 -> the stochastic seman-zeroing branch never fires.

    # ---- fold batch items along the lane axis (bb items per grid step) ------
    bb = _pick_bb(B)
    G = B // bb
    pts_flat = (pts_cf.reshape(G, bb, 8, N_PTS)
                .transpose(0, 2, 1, 3).reshape(G, 8, bb * N_PTS))
    prior_cf = shape_prior.astype(jnp.float32).transpose(0, 2, 1)   # (B, 3, Np)
    Np = prior_cf.shape[2]
    prior_flat = (prior_cf.reshape(G, bb, 3, Np)
                  .transpose(0, 2, 1, 3).reshape(G, 3, bb * Np))

    wA, w1se_T, wB, bias = _pack_weights(params)
    pose_out, recon_out = point_posenet(pts_flat, prior_flat, wA, w1se_T, wB, bias,
                                        bb=bb, n_pts=N_PTS, n_prior=Np)

    pose = pose_out.transpose(0, 2, 1).reshape(B, P_HEAD)           # (B, 16)
    recon = (recon_out.reshape(G, 3, bb, Np)
             .transpose(0, 2, 3, 1).reshape(B, Np, 3))

    output_dict["recon_model"] = recon                          # prior + deform
    output_dict["p_green_R"] = pose[:, 0:3]
    output_dict["p_red_R"] = pose[:, 3:6]
    output_dict["f_green_R"] = pose[:, 6:7]
    output_dict["f_red_R"] = pose[:, 7:8]
    output_dict["Pred_T"] = pose[:, 8:11]
    output_dict["Pred_s"] = pose[:, 11:14] + mean_shape         # delta + mean_shape
    return output_dict


# =================== demo ==============================================
if __name__ == "__main__":
    key = jax.random.PRNGKey(0)
    kp, k1, k2, k3, k4 = jax.random.split(key, 5)
    params = init_params(kp)

    B, H, W = 2, 16, 16
    depth = 0.5 + jax.random.uniform(k1, (B, 1, H, W), dtype=jnp.float32)
    rgb = jax.random.uniform(k2, (B, 3, H, W), dtype=jnp.float32)
    camK = jnp.broadcast_to(
        jnp.array([[100.0, 0.0, 8.0],
                   [0.0, 100.0, 8.0],
                   [0.0, 0.0, 1.0]], dtype=jnp.float32), (B, 3, 3))
    obj_id = jnp.array([0, 1], dtype=jnp.int32)
    mean_shape = 0.1 + 0.05 * jax.random.uniform(k3, (B, 3), dtype=jnp.float32)
    shape_prior = 0.1 * jax.random.normal(k4, (B, N_PRIOR, 3), dtype=jnp.float32)

    out = self_sketch_pose_net_forward(params, depth, obj_id, camK, mean_shape,
                                       rgb=rgb, shape_prior=shape_prior)
    jax.block_until_ready(jax.tree_util.tree_leaves(out))

    assert out["recon_model"].shape == (B, N_PRIOR, 3)
    assert out["mask"].shape == (B, 2, H, W)
    assert out["p_green_R"].shape == (B, 3) and out["p_red_R"].shape == (B, 3)
    assert out["f_green_R"].shape == (B, 1) and out["f_red_R"].shape == (B, 1)
    assert out["Pred_T"].shape == (B, 3) and out["Pred_s"].shape == (B, 3)
    print("KERNEL_OK")
</pallas_src>

<mosaic_0001>
module attributes {stable_mosaic.version = 11 : i64} {
  func.func @_point_pose_kernel(%arg0: i32, %arg1: memref<1x8x256xf32, #tpu.memory_space<vmem>>, %arg2: memref<1x3x256xf32, #tpu.memory_space<vmem>>, %arg3: memref<160x3xf32, #tpu.memory_space<vmem>>, %arg4: memref<64x32xf32, #tpu.memory_space<vmem>>, %arg5: memref<152x64xf32, #tpu.memory_space<vmem>>, %arg6: memref<248x1xf32, #tpu.memory_space<vmem>>, %arg7: memref<1x16x2xf32, #tpu.memory_space<vmem>>, %arg8: memref<1x3x256xf32, #tpu.memory_space<vmem>>) attributes {dimension_semantics = [#tpu.dimension_semantics<parallel>], iteration_bounds = array<i64: 1>, scalar_prefetch = 0 : i64, scratch_operands = 0 : i64, tpu.core_type = #tpu.core_type<tc>, window_params = [{transform_indices = @transform_0, window_bounds = array<i64: 1, 8, 256>}, {transform_indices = @transform_1, window_bounds = array<i64: 1, 3, 256>}, {pipeline_mode = #tpu.pipeline_mode<synchronous>, transform_indices = @transform_2, window_bounds = array<i64: 160, 3>}, {pipeline_mode = #tpu.pipeline_mode<synchronous>, transform_indices = @transform_3, window_bounds = array<i64: 64, 32>}, {pipeline_mode = #tpu.pipeline_mode<synchronous>, transform_indices = @transform_4, window_bounds = array<i64: 152, 64>}, {pipeline_mode = #tpu.pipeline_mode<synchronous>, transform_indices = @transform_5, window_bounds = array<i64: 248, 1>}, {transform_indices = @transform_6, window_bounds = array<i64: 1, 16, 2>}, {transform_indices = @transform_7, window_bounds = array<i64: 1, 3, 256>}]} {
    %c0 = arith.constant 0 : index
    %c0_0 = arith.constant 0 : index
    %c0_1 = arith.constant 0 : index
    %0 = vector.load %arg1[%c0, %c0_0, %c0_1] : memref<1x8x256xf32, #tpu.memory_space<vmem>>, vector<1x8x256xf32>
    %1 = vector.shape_cast %0 : vector<1x8x256xf32> to vector<8x256xf32>
    %2 = vector.extract_strided_slice %1 {offsets = [0, 0], sizes = [1, 256], strides = [1, 1]} : vector<8x256xf32> to vector<1x256xf32>
    %3 = vector.extract_strided_slice %1 {offsets = [1, 0], sizes = [1, 256], strides = [1, 1]} : vector<8x256xf32> to vector<1x256xf32>
    %4 = vector.extract_strided_slice %1 {offsets = [2, 0], sizes = [1, 256], strides = [1, 1]} : vector<8x256xf32> to vector<1x256xf32>
    %5 = vector.extract_strided_slice %1 {offsets = [3, 0], sizes = [1, 256], strides = [1, 1]} : vector<8x256xf32> to vector<1x256xf32>
    %6 = vector.extract_strided_slice %1 {offsets = [4, 0], sizes = [1, 256], strides = [1, 1]} : vector<8x256xf32> to vector<1x256xf32>
    %7 = vector.extract_strided_slice %1 {offsets = [5, 0], sizes = [1, 256], strides = [1, 1]} : vector<8x256xf32> to vector<1x256xf32>
    %c0_2 = arith.constant 0 : index
    %c0_3 = arith.constant 0 : index
    %8 = vector.load %arg3[%c0_2, %c0_3] : memref<160x3xf32, #tpu.memory_space<vmem>>, vector<32x3xf32>
    %c32 = arith.constant 32 : index
    %c0_4 = arith.constant 0 : index
    %9 = vector.load %arg3[%c32, %c0_4] : memref<160x3xf32, #tpu.memory_space<vmem>>, vector<64x3xf32>
    %c96 = arith.constant 96 : index
    %c0_5 = arith.constant 0 : index
    %10 = vector.load %arg3[%c96, %c0_5] : memref<160x3xf32, #tpu.memory_space<vmem>>, vector<64x3xf32>
    %c0_6 = arith.constant 0 : index
    %c0_7 = arith.constant 0 : index
    %11 = vector.load %arg6[%c0_6, %c0_7] : memref<248x1xf32, #tpu.memory_space<vmem>>, vector<32x1xf32>
    %c32_8 = arith.constant 32 : index
    %c0_9 = arith.constant 0 : index
    %12 = vector.load %arg6[%c32_8, %c0_9] : memref<248x1xf32, #tpu.memory_space<vmem>>, vector<64x1xf32>
    %c96_10 = arith.constant 96 : index
    %c0_11 = arith.constant 0 : index
    %13 = vector.load %arg6[%c96_10, %c0_11] : memref<248x1xf32, #tpu.memory_space<vmem>>, vector<64x1xf32>
    %c160 = arith.constant 160 : index
    %c0_12 = arith.constant 0 : index
    %14 = vector.load %arg6[%c160, %c0_12] : memref<248x1xf32, #tpu.memory_space<vmem>>, vector<80x1xf32>
    %c240 = arith.constant 240 : index
    %c0_13 = arith.constant 0 : index
    %15 = vector.load %arg6[%c240, %c0_13] : memref<248x1xf32, #tpu.memory_space<vmem>>, vector<3x1xf32>
    %16 = vector.extract_strided_slice %8 {offsets = [0, 0], sizes = [32, 1], strides = [1, 1]} : vector<32x3xf32> to vector<32x1xf32>
    %17 = vector.broadcast %16 : vector<32x1xf32> to vector<32x256xf32>
    %18 = vector.broadcast %2 : vector<1x256xf32> to vector<32x256xf32>
    %19 = arith.mulf %17, %18 : vector<32x256xf32>
    %20 = vector.extract_strided_slice %8 {offsets = [0, 1], sizes = [32, 1], strides = [1, 1]} : vector<32x3xf32> to vector<32x1xf32>
    %21 = vector.broadcast %20 : vector<32x1xf32> to vector<32x256xf32>
    %22 = vector.broadcast %3 : vector<1x256xf32> to vector<32x256xf32>
    %23 = arith.mulf %21, %22 : vector<32x256xf32>
    %24 = arith.addf %19, %23 : vector<32x256xf32>
    %25 = vector.extract_strided_slice %8 {offsets = [0, 2], sizes = [32, 1], strides = [1, 1]} : vector<32x3xf32> to vector<32x1xf32>
    %26 = vector.broadcast %25 : vector<32x1xf32> to vector<32x256xf32>
    %27 = vector.broadcast %4 : vector<1x256xf32> to vector<32x256xf32>
    %28 = arith.mulf %26, %27 : vector<32x256xf32>
    %29 = arith.addf %24, %28 : vector<32x256xf32>
    %30 = vector.broadcast %11 : vector<32x1xf32> to vector<32x256xf32>
    %31 = arith.addf %29, %30 : vector<32x256xf32>
    %32 = arith.mulf %6, %5 : vector<1x256xf32>
    %33 = arith.mulf %7, %5 : vector<1x256xf32>
    %34 = vector.extract_strided_slice %9 {offsets = [0, 0], sizes = [64, 1], strides = [1, 1]} : vector<64x3xf32> to vector<64x1xf32>
    %35 = vector.broadcast %34 : vector<64x1xf32> to vector<64x256xf32>
    %36 = vector.broadcast %32 : vector<1x256xf32> to vector<64x256xf32>
    %37 = arith.mulf %35, %36 : vector<64x256xf32>
    %38 = vector.extract_strided_slice %9 {offsets = [0, 1], sizes = [64, 1], strides = [1, 1]} : vector<64x3xf32> to vector<64x1xf32>
    %39 = vector.broadcast %38 : vector<64x1xf32> to vector<64x256xf32>
    %40 = vector.broadcast %33 : vector<1x256xf32> to vector<64x256xf32>
    %41 = arith.mulf %39, %40 : vector<64x256xf32>
    %42 = arith.addf %37, %41 : vector<64x256xf32>
    %43 = vector.extract_strided_slice %9 {offsets = [0, 2], sizes = [64, 1], strides = [1, 1]} : vector<64x3xf32> to vector<64x1xf32>
    %44 = vector.broadcast %43 : vector<64x1xf32> to vector<64x256xf32>
    %45 = vector.broadcast %5 : vector<1x256xf32> to vector<64x256xf32>
    %46 = arith.mulf %44, %45 : vector<64x256xf32>
    %47 = arith.addf %42, %46 : vector<64x256xf32>
    %c0_14 = arith.constant 0 : index
    %c0_15 = arith.constant 0 : index
    %48 = vector.load %arg4[%c0_14, %c0_15] : memref<64x32xf32, #tpu.memory_space<vmem>>, vector<64x32xf32>
    %cst = arith.constant dense<0.000000e+00> : vector<64x256xf32>
    %49 = tpu.matmul %48, %31, %cst {dimension_numbers = #tpu.dot_dimension_numbers<[1], [0], [0], [1], [0, 0, 1, 1], [], []>} : vector<64x32xf32>, vector<32x256xf32>, vector<64x256xf32> -> vector<64x256xf32>
    %50 = arith.addf %47, %49 : vector<64x256xf32>
    %51 = vector.broadcast %12 : vector<64x1xf32> to vector<64x256xf32>
    %52 = arith.addf %50, %51 : vector<64x256xf32>
    %cst_16 = arith.constant 0.000000e+00 : f32
    %53 = vector.broadcast %cst_16 : f32 to vector<64x256xf32>
    %54 = arith.maximumf %52, %53 : vector<64x256xf32>
    %c0_17 = arith.constant 0 : index
    %c0_18 = arith.constant 0 : index
    %55 = vector.load %arg5[%c0_17, %c0_18] : memref<152x64xf32, #tpu.memory_space<vmem>>, vector<64x64xf32>
    %cst_19 = arith.constant dense<0.000000e+00> : vector<64x256xf32>
    %56 = tpu.matmul %55, %54, %cst_19 {dimension_numbers = #tpu.dot_dimension_numbers<[1], [0], [0], [1], [0, 0, 1, 1], [], []>} : vector<64x64xf32>, vector<64x256xf32>, vector<64x256xf32> -> vector<64x256xf32>
    %57 = vector.broadcast %13 : vector<64x1xf32> to vector<64x256xf32>
    %58 = arith.addf %56, %57 : vector<64x256xf32>
    %cst_20 = arith.constant 0.000000e+00 : f32
    %59 = vector.broadcast %cst_20 : f32 to vector<64x256xf32>
    %60 = arith.maximumf %58, %59 : vector<64x256xf32>
    %61 = vector.extract_strided_slice %60 {offsets = [0, 0], sizes = [64, 128], strides = [1, 1]} : vector<64x256xf32> to vector<64x128xf32>
    %cst_21 = arith.constant dense<0xFF800000> : vector<64xf32>
    %62 = vector.multi_reduction <maximumf>, %61, %cst_21 [1] : vector<64x128xf32> to vector<64xf32>
    %63 = vector.shape_cast %62 : vector<64xf32> to vector<64x1xf32>
    %64 = vector.extract_strided_slice %60 {offsets = [0, 128], sizes = [64, 128], strides = [1, 1]} : vector<64x256xf32> to vector<64x128xf32>
    %cst_22 = arith.constant dense<0xFF800000> : vector<64xf32>
    %65 = vector.multi_reduction <maximumf>, %64, %cst_22 [1] : vector<64x128xf32> to vector<64xf32>
    %66 = vector.shape_cast %65 : vector<64xf32> to vector<64x1xf32>
    %67 = tpu.concatenate %63, %66 in 1 : vector<64x1xf32>, vector<64x1xf32> -> vector<64x2xf32>
    %c64 = arith.constant 64 : index
    %c0_23 = arith.constant 0 : index
    %68 = vector.load %arg5[%c64, %c0_23] : memref<152x64xf32, #tpu.memory_space<vmem>>, vector<80x64xf32>
    %cst_24 = arith.constant dense<0.000000e+00> : vector<80x2xf32>
    %69 = tpu.matmul %68, %67, %cst_24 {dimension_numbers = #tpu.dot_dimension_numbers<[1], [0], [0], [1], [0, 0, 1, 1], [], []>} : vector<80x64xf32>, vector<64x2xf32>, vector<80x2xf32> -> vector<80x2xf32>
    %70 = vector.broadcast %14 : vector<80x1xf32> to vector<80x2xf32>
    %71 = arith.addf %69, %70 : vector<80x2xf32>
    %72 = vector.extract_strided_slice %71 {offsets = [0, 0], sizes = [16, 2], strides = [1, 1]} : vector<80x2xf32> to vector<16x2xf32>
    %73 = vector.extract_strided_slice %72 {offsets = [0, 0], sizes = [3, 2], strides = [1, 1]} : vector<16x2xf32> to vector<3x2xf32>
    %74 = vector.extract_strided_slice %72 {offsets = [3, 0], sizes = [3, 2], strides = [1, 1]} : vector<16x2xf32> to vector<3x2xf32>
    %75 = arith.mulf %73, %73 : vector<3x2xf32>
    %cst_25 = arith.constant dense<0.000000e+00> : vector<2xf32>
    %76 = vector.multi_reduction <add>, %75, %cst_25 [0] : vector<3x2xf32> to vector<2xf32>
    %77 = vector.shape_cast %76 : vector<2xf32> to vector<1x2xf32>
    %cst_26 = arith.constant 9.99999993E-9 : f32
    %78 = vector.broadcast %cst_26 : f32 to vector<1x2xf32>
    %79 = arith.addf %77, %78 : vector<1x2xf32>
    %80 = math.rsqrt %79 : vector<1x2xf32>
    %81 = arith.mulf %74, %74 : vector<3x2xf32>
    %cst_27 = arith.constant dense<0.000000e+00> : vector<2xf32>
    %82 = vector.multi_reduction <add>, %81, %cst_27 [0] : vector<3x2xf32> to vector<2xf32>
    %83 = vector.shape_cast %82 : vector<2xf32> to vector<1x2xf32>
    %cst_28 = arith.constant 9.99999993E-9 : f32
    %84 = vector.broadcast %cst_28 : f32 to vector<1x2xf32>
    %85 = arith.addf %83, %84 : vector<1x2xf32>
    %86 = math.rsqrt %85 : vector<1x2xf32>
    %87 = tpu.iota {dimensions = array<i32: 0>} : vector<16x2xi32>
    %c3_i32 = arith.constant 3 : i32
    %88 = vector.broadcast %c3_i32 : i32 to vector<16x2xi32>
    %89 = arith.cmpi slt, %87, %88 : vector<16x2xi32>
    %c6_i32 = arith.constant 6 : i32
    %90 = vector.broadcast %c6_i32 : i32 to vector<16x2xi32>
    %91 = arith.cmpi slt, %87, %90 : vector<16x2xi32>
    %cst_29 = arith.constant 1.000000e+00 : f32
    %92 = vector.shape_cast %86 : vector<1x2xf32> to vector<1x2xf32>
    %93 = vector.broadcast %92 : vector<1x2xf32> to vector<16x2xf32>
    %94 = vector.broadcast %cst_29 : f32 to vector<16x2xf32>
    %95 = arith.select %91, %93, %94 : vector<16x2xi1>, vector<16x2xf32>
    %96 = vector.shape_cast %80 : vector<1x2xf32> to vector<1x2xf32>
    %97 = vector.broadcast %96 : vector<1x2xf32> to vector<16x2xf32>
    %98 = arith.select %89, %97, %95 : vector<16x2xi1>, vector<16x2xf32>
    %cst_30 = arith.constant 0.000000e+00 : f32
    %99 = vector.broadcast %cst_30 : f32 to vector<16x2xf32>
    %100 = arith.subf %99, %72 : vector<16x2xf32>
    %101 = math.exp %100 : vector<16x2xf32>
    %cst_31 = arith.constant 1.000000e+00 : f32
    %102 = vector.broadcast %cst_31 : f32 to vector<16x2xf32>
    %103 = arith.addf %102, %101 : vector<16x2xf32>
    %104 = tpu.reciprocal %103 {approx = true} : vector<16x2xf32> -> vector<16x2xf32>
    %c6_i32_32 = arith.constant 6 : i32
    %105 = vector.broadcast %c6_i32_32 : i32 to vector<16x2xi32>
    %106 = arith.cmpi sge, %87, %105 : vector<16x2xi32>
    %c8_i32 = arith.constant 8 : i32
    %107 = vector.broadcast %c8_i32 : i32 to vector<16x2xi32>
    %108 = arith.cmpi slt, %87, %107 : vector<16x2xi32>
    %109 = arith.andi %106, %108 : vector<16x2xi1>
    %110 = arith.mulf %72, %98 : vector<16x2xf32>
    %111 = arith.select %109, %104, %110 : vector<16x2xi1>, vector<16x2xf32>
    %c0_33 = arith.constant 0 : index
    %c0_34 = arith.constant 0 : index
    %c0_35 = arith.constant 0 : index
    %112 = vector.load %arg7[%c0_33, %c0_34, %c0_35] : memref<1x16x2xf32, #tpu.memory_space<vmem>>, vector<1x16x2xf32>
    %113 = vector.shape_cast %112 : vector<1x16x2xf32> to vector<16x2xf32>
    %114 = vector.shape_cast %111 : vector<16x2xf32> to vector<1x16x2xf32>
    tpu.vector_store %arg7[%c0_33, %c0_34, %c0_35], %114 {strides = array<i32>} : memref<1x16x2xf32, #tpu.memory_space<vmem>>, vector<1x16x2xf32>,
    %c0_36 = arith.constant 0 : index
    %c0_37 = arith.constant 0 : index
    %c0_38 = arith.constant 0 : index
    %115 = vector.load %arg2[%c0_36, %c0_37, %c0_38] : memref<1x3x256xf32, #tpu.memory_space<vmem>>, vector<1x3x256xf32>
    %116 = vector.shape_cast %115 : vector<1x3x256xf32> to vector<3x256xf32>
    %117 = vector.extract_strided_slice %71 {offsets = [16, 0], sizes = [64, 2], strides = [1, 1]} : vector<80x2xf32> to vector<64x2xf32>
    %118 = vector.extract_strided_slice %117 {offsets = [0, 0], sizes = [64, 1], strides = [1, 1]} : vector<64x2xf32> to vector<64x1xf32>
    %119 = vector.shape_cast %118 : vector<64x1xf32> to vector<64x1xf32>
    %120 = vector.broadcast %119 : vector<64x1xf32> to vector<64x128xf32>
    %121 = vector.extract_strided_slice %117 {offsets = [0, 1], sizes = [64, 1], strides = [1, 1]} : vector<64x2xf32> to vector<64x1xf32>
    %122 = vector.shape_cast %121 : vector<64x1xf32> to vector<64x1xf32>
    %123 = vector.broadcast %122 : vector<64x1xf32> to vector<64x128xf32>
    %124 = tpu.concatenate %120, %123 in 1 : vector<64x128xf32>, vector<64x128xf32> -> vector<64x256xf32>
    %125 = vector.extract_strided_slice %10 {offsets = [0, 0], sizes = [64, 1], strides = [1, 1]} : vector<64x3xf32> to vector<64x1xf32>
    %126 = vector.extract_strided_slice %116 {offsets = [0, 0], sizes = [1, 256], strides = [1, 1]} : vector<3x256xf32> to vector<1x256xf32>
    %127 = vector.broadcast %125 : vector<64x1xf32> to vector<64x256xf32>
    %128 = vector.broadcast %126 : vector<1x256xf32> to vector<64x256xf32>
    %129 = arith.mulf %127, %128 : vector<64x256xf32>
    %130 = vector.extract_strided_slice %10 {offsets = [0, 1], sizes = [64, 1], strides = [1, 1]} : vector<64x3xf32> to vector<64x1xf32>
    %131 = vector.extract_strided_slice %116 {offsets = [1, 0], sizes = [1, 256], strides = [1, 1]} : vector<3x256xf32> to vector<1x256xf32>
    %132 = vector.broadcast %130 : vector<64x1xf32> to vector<64x256xf32>
    %133 = vector.broadcast %131 : vector<1x256xf32> to vector<64x256xf32>
    %134 = arith.mulf %132, %133 : vector<64x256xf32>
    %135 = arith.addf %129, %134 : vector<64x256xf32>
    %136 = vector.extract_strided_slice %10 {offsets = [0, 2], sizes = [64, 1], strides = [1, 1]} : vector<64x3xf32> to vector<64x1xf32>
    %137 = vector.extract_strided_slice %116 {offsets = [2, 0], sizes = [1, 256], strides = [1, 1]} : vector<3x256xf32> to vector<1x256xf32>
    %138 = vector.broadcast %136 : vector<64x1xf32> to vector<64x256xf32>
    %139 = vector.broadcast %137 : vector<1x256xf32> to vector<64x256xf32>
    %140 = arith.mulf %138, %139 : vector<64x256xf32>
    %141 = arith.addf %135, %140 : vector<64x256xf32>
    %142 = arith.addf %141, %124 : vector<64x256xf32>
    %cst_39 = arith.constant 0.000000e+00 : f32
    %143 = vector.broadcast %cst_39 : f32 to vector<64x256xf32>
    %144 = arith.maximumf %142, %143 : vector<64x256xf32>
    %c144 = arith.constant 144 : index
    %c0_40 = arith.constant 0 : index
    %145 = vector.load %arg5[%c144, %c0_40] : memref<152x64xf32, #tpu.memory_space<vmem>>, vector<3x64xf32>
    %cst_41 = arith.constant dense<0.000000e+00> : vector<3x256xf32>
    %146 = tpu.matmul %145, %144, %cst_41 {dimension_numbers = #tpu.dot_dimension_numbers<[1], [0], [0], [1], [0, 0, 1, 1], [], []>} : vector<3x64xf32>, vector<64x256xf32>, vector<3x256xf32> -> vector<3x256xf32>
    %147 = vector.broadcast %15 : vector<3x1xf32> to vector<3x256xf32>
    %148 = arith.addf %146, %147 : vector<3x256xf32>
    %149 = arith.addf %116, %148 : vector<3x256xf32>
    %c0_42 = arith.constant 0 : index
    %c0_43 = arith.constant 0 : index
    %c0_44 = arith.constant 0 : index
    %150 = vector.load %arg8[%c0_42, %c0_43, %c0_44] : memref<1x3x256xf32, #tpu.memory_space<vmem>>, vector<1x3x256xf32>
    %151 = vector.shape_cast %150 : vector<1x3x256xf32> to vector<3x256xf32>
    %152 = vector.shape_cast %149 : vector<3x256xf32> to vector<1x3x256xf32>
    tpu.vector_store %arg8[%c0_42, %c0_43, %c0_44], %152 {strides = array<i32>} : memref<1x3x256xf32, #tpu.memory_space<vmem>>, vector<1x3x256xf32>,
    return
  }
  func.func @transform_0(%arg0: i32) -> (i32, i32, i32) {
    %c0_i32 = arith.constant 0 : i32
    %c0_i32_0 = arith.constant 0 : i32
    %c0_i32_1 = arith.constant 0 : i32
    return %arg0, %c0_i32, %c0_i32_0 : i32, i32, i32
  }
  func.func @transform_1(%arg0: i32) -> (i32, i32, i32) {
    %c0_i32 = arith.constant 0 : i32
    %c0_i32_0 = arith.constant 0 : i32
    %c0_i32_1 = arith.constant 0 : i32
    return %arg0, %c0_i32, %c0_i32_0 : i32, i32, i32
  }
  func.func @transform_2(%arg0: i32) -> (i32, i32) {
    %c0_i32 = arith.constant 0 : i32
    %c0_i32_0 = arith.constant 0 : i32
    %c0_i32_1 = arith.constant 0 : i32
    return %c0_i32, %c0_i32_0 : i32, i32
  }
  func.func @transform_3(%arg0: i32) -> (i32, i32) {
    %c0_i32 = arith.constant 0 : i32
    %c0_i32_0 = arith.constant 0 : i32
    %c0_i32_1 = arith.constant 0 : i32
    return %c0_i32, %c0_i32_0 : i32, i32
  }
  func.func @transform_4(%arg0: i32) -> (i32, i32) {
    %c0_i32 = arith.constant 0 : i32
    %c0_i32_0 = arith.constant 0 : i32
    %c0_i32_1 = arith.constant 0 : i32
    return %c0_i32, %c0_i32_0 : i32, i32
  }
  func.func @transform_5(%arg0: i32) -> (i32, i32) {
    %c0_i32 = arith.constant 0 : i32
    %c0_i32_0 = arith.constant 0 : i32
    %c0_i32_1 = arith.constant 0 : i32
    return %c0_i32, %c0_i32_0 : i32, i32
  }
  func.func @transform_6(%arg0: i32) -> (i32, i32, i32) {
    %c0_i32 = arith.constant 0 : i32
    %c0_i32_0 = arith.constant 0 : i32
    %c0_i32_1 = arith.constant 0 : i32
    return %arg0, %c0_i32, %c0_i32_0 : i32, i32, i32
  }
  func.func @transform_7(%arg0: i32) -> (i32, i32, i32) {
    %c0_i32 = arith.constant 0 : i32
    %c0_i32_0 = arith.constant 0 : i32
    %c0_i32_1 = arith.constant 0 : i32
    return %arg0, %c0_i32, %c0_i32_0 : i32, i32, i32
  }
}

module attributes {stable_mosaic.version = 11 : i64} {
  func.func @_mask_kernel(%arg0: i32, %arg1: i32, %arg2: memref<4xf32, #tpu.memory_space<smem>>, %arg3: memref<1x3x8x128xf32, #tpu.memory_space<vmem>>, %arg4: memref<1x2x8x128xf32, #tpu.memory_space<vmem>>) attributes {dimension_semantics = [#tpu.dimension_semantics<parallel>, #tpu.dimension_semantics<parallel>], iteration_bounds = array<i64: 2, 1>, scalar_prefetch = 0 : i64, scratch_operands = 0 : i64, tpu.core_type = #tpu.core_type<tc>, window_params = [{transform_indices = @transform_0, window_bounds = array<i64: 4>}, {transform_indices = @transform_1, window_bounds = array<i64: 1, 3, 8, 128>}, {transform_indices = @transform_2, window_bounds = array<i64: 1, 2, 8, 128>}]} {
    %c0 = arith.constant 0 : index
    %c0_0 = arith.constant 0 : index
    %c0_1 = arith.constant 0 : index
    %c0_2 = arith.constant 0 : index
    %0 = vector.load %arg3[%c0, %c0_0, %c0_1, %c0_2] : memref<1x3x8x128xf32, #tpu.memory_space<vmem>>, vector<1x3x8x128xf32>
    %1 = vector.shape_cast %0 : vector<1x3x8x128xf32> to vector<3x8x128xf32>
    %2 = vector.extract_strided_slice %1 {offsets = [0, 0, 0], sizes = [1, 8, 128], strides = [1, 1, 1]} : vector<3x8x128xf32> to vector<1x8x128xf32>
    %3 = vector.extract_strided_slice %1 {offsets = [1, 0, 0], sizes = [1, 8, 128], strides = [1, 1, 1]} : vector<3x8x128xf32> to vector<1x8x128xf32>
    %4 = vector.extract_strided_slice %1 {offsets = [2, 0, 0], sizes = [1, 8, 128], strides = [1, 1, 1]} : vector<3x8x128xf32> to vector<1x8x128xf32>
    %c0_3 = arith.constant 0 : index
    %5 = memref.load %arg2[%c0_3] : memref<4xf32, #tpu.memory_space<smem>>
    %6 = vector.broadcast %5 : f32 to vector<1x8x128xf32>
    %7 = arith.mulf %6, %2 : vector<1x8x128xf32>
    %c1 = arith.constant 1 : index
    %8 = memref.load %arg2[%c1] : memref<4xf32, #tpu.memory_space<smem>>
    %9 = vector.broadcast %8 : f32 to vector<1x8x128xf32>
    %10 = arith.mulf %9, %3 : vector<1x8x128xf32>
    %11 = arith.addf %7, %10 : vector<1x8x128xf32>
    %c2 = arith.constant 2 : index
    %12 = memref.load %arg2[%c2] : memref<4xf32, #tpu.memory_space<smem>>
    %13 = vector.broadcast %12 : f32 to vector<1x8x128xf32>
    %14 = arith.mulf %13, %4 : vector<1x8x128xf32>
    %15 = arith.addf %11, %14 : vector<1x8x128xf32>
    %c3 = arith.constant 3 : index
    %16 = memref.load %arg2[%c3] : memref<4xf32, #tpu.memory_space<smem>>
    %17 = vector.broadcast %16 : f32 to vector<1x8x128xf32>
    %18 = arith.addf %15, %17 : vector<1x8x128xf32>
    %cst = arith.constant 0.000000e+00 : f32
    %19 = vector.broadcast %cst : f32 to vector<1x8x128xf32>
    %20 = arith.subf %19, %18 : vector<1x8x128xf32>
    %21 = math.exp %20 : vector<1x8x128xf32>
    %cst_4 = arith.constant 1.000000e+00 : f32
    %22 = vector.broadcast %cst_4 : f32 to vector<1x8x128xf32>
    %23 = arith.addf %22, %21 : vector<1x8x128xf32>
    %24 = tpu.reciprocal %23 {approx = true} : vector<1x8x128xf32> -> vector<1x8x128xf32>
    %cst_5 = arith.constant 1.000000e+00 : f32
    %25 = vector.broadcast %cst_5 : f32 to vector<1x8x128xf32>
    %26 = arith.subf %25, %24 : vector<1x8x128xf32>
    %c0_6 = arith.constant 0 : index
    %c0_7 = arith.constant 0 : index
    %c0_8 = arith.constant 0 : index
    %c0_9 = arith.constant 0 : index
    %27 = vector.load %arg4[%c0_6, %c0_7, %c0_8, %c0_9] : memref<1x2x8x128xf32, #tpu.memory_space<vmem>>, vector<1x1x8x128xf32>
    %28 = vector.shape_cast %27 : vector<1x1x8x128xf32> to vector<1x8x128xf32>
    %29 = vector.shape_cast %26 : vector<1x8x128xf32> to vector<1x1x8x128xf32>
    tpu.vector_store %arg4[%c0_6, %c0_7, %c0_8, %c0_9], %29 {strides = array<i32>} : memref<1x2x8x128xf32, #tpu.memory_space<vmem>>, vector<1x1x8x128xf32>,
    %c0_10 = arith.constant 0 : index
    %c1_11 = arith.constant 1 : index
    %c0_12 = arith.constant 0 : index
    %c0_13 = arith.constant 0 : index
    %30 = vector.load %arg4[%c0_10, %c1_11, %c0_12, %c0_13] : memref<1x2x8x128xf32, #tpu.memory_space<vmem>>, vector<1x1x8x128xf32>
    %31 = vector.shape_cast %30 : vector<1x1x8x128xf32> to vector<1x8x128xf32>
    %32 = vector.shape_cast %24 : vector<1x8x128xf32> to vector<1x1x8x128xf32>
    tpu.vector_store %arg4[%c0_10, %c1_11, %c0_12, %c0_13], %32 {strides = array<i32>} : memref<1x2x8x128xf32, #tpu.memory_space<vmem>>, vector<1x1x8x128xf32>,
    return
  }
  func.func @transform_0(%arg0: i32, %arg1: i32) -> i32 {
    %c0_i32 = arith.constant 0 : i32
    %c0_i32_0 = arith.constant 0 : i32
    return %c0_i32 : i32
  }
  func.func @transform_1(%arg0: i32, %arg1: i32) -> (i32, i32, i32, i32) {
    %c0_i32 = arith.constant 0 : i32
    %c0_i32_0 = arith.constant 0 : i32
    %c0_i32_1 = arith.constant 0 : i32
    return %arg0, %c0_i32, %arg1, %c0_i32_0 : i32, i32, i32, i32
  }
  func.func @transform_2(%arg0: i32, %arg1: i32) -> (i32, i32, i32, i32) {
    %c0_i32 = arith.constant 0 : i32
    %c0_i32_0 = arith.constant 0 : i32
    %c0_i32_1 = arith.constant 0 : i32
    return %arg0, %c0_i32, %arg1, %c0_i32_0 : i32, i32, i32, i32
  }
}

</mosaic_0001>

<llo_original>
// kernel: self_sketch_pose_net_forward.2
$region0: #{self_sketch_pose_net_forward.2}
  #allocation0 [shape = 'u32[]', space=smem, size = 0x4, offset = 0x4, fixed_abs, tag = 'smem constant byte address 0x4 - core index']
  #allocation1 [shape = 'u32[144,128]{1,0:T(1,128)}', space=vmem, size = 0x12000, scoped, tag = 'internal scratch']
  %s0 = inlined_call_operand.vmem [shape: f32[4], index: 0, kind: input, shape index: {}]
  %s1 = inlined_call_operand.vmem [shape: f32[2,3,8,128], index: 1, kind: input, shape index: {}]
  %s2 = inlined_call_operand.vmem [shape: f32[2,2,8,128], index: 2, kind: output, shape index: {}]
  %s3 = sld [smem:[#allocation0]]
  $region45: #{self_sketch_pose_net_forward.2} parent=0
    _
  %s5 = ssub.s32 1, %s3
  %s6 = scalar_select 0, %s5, %s3
  $region1: #{self_sketch_pose_net_forward.2} parent=0
    #allocation2 [shape = 'u8[512]{0}', space=smem, size = 0x200, scoped, tag = 'input window, operand 0, single buffered']
    #allocation3 [shape = 's32[2]{0}', space=sflag, size = 0x8, scoped, tag = 'scoped memory for self_sketch_pose_net_forward.2']
    %7 = vsyncpa [#allocation3], 0
    loop: start=0, step=1, limit=4
    $region2: #{self_sketch_pose_net_forward.2} parent=1 // loop_pre_header
      _
    $region3: #{self_sketch_pose_net_forward.2} parent=1 // loop_header
      %s9 = sphi 0, %s13
      %p10 = scmp.ge.s32.totalorder %s9, 4
      %s16 = sphi 0, %s28
      %s17 = sphi 0, %s24
      %s18 = sphi 0, %s16
      %s19 = sphi 0, %s17
      %s20 = sphi 0, %s18
      %s21 = sphi 0, %s19
      %s29 = sphi 0, %s29
      %s31 = sphi 0, %s29
      %s32 = sphi 0, %s31
      %s46 = sphi 0, %s32
      %s54 = sphi 0, %s56
      %s57 = sphi 0, %s54
      %s58 = sphi 0, %s57
      %s74 = sphi 0, %s58
      %s82 = sphi 0, %s84
      %s85 = sphi 0, %s82
      %s86 = sphi 0, %s85
      %s102 = sphi 0, %s86
    $region4: #{self_sketch_pose_net_forward.2} parent=1 // loop_header_branch
      %12 = sbr.rel (%p10) target = $region8
    $region5: #{self_sketch_pose_net_forward.2} parent=1 // loop_body
      %s14 = ssub.s32 %s9, 1
      %s15 = ssub.s32 %s9, 2
      %s22 = sadd.s32 1, %s17
      %p23 = scmp.ge.s32.totalorder %s22, 1
      %s24 = scalar_select %p23, 0, %s22
      %s25 = sadd.s32 1, %s16
      %s26 = scalar_select %p23, %s25, %s16
      %p27 = scmp.ge.s32.totalorder %s26, 2
      %s28 = scalar_select %p27, 0, %s26
      %s30 = sadd.s32 %s29, 1
      %p33 = scmp.eq.s32.totalorder %s9, 1
      %p34 = scmp.ne.s32.totalorder %s29, %s31
      %p35 = scmp.eq.s32.totalorder %s9, 0
      %p36 = por %p34, %p35
      %p37 = scmp.ne.s32.totalorder %s29, %s31
      %p38 = scmp.eq.s32.totalorder %s14, 1
      %p39 = por %p37, %p38
      %p40 = scmp.ne.s32.totalorder %s31, %s32
      %p41 = scmp.eq.s32.totalorder %s14, 0
      %p42 = por %p40, %p41
      %p43 = scmp.ne.s32.totalorder %s31, %s32
      %p44 = scmp.eq.s32.totalorder %s15, 1
      %p45 = por %p43, %p44
      %p47 = scmp.ne.s32.totalorder %s32, %s46
      %p48 = scmp.eq.s32.totalorder %s15, 0
      %p49 = por %p47, %p48
      %s50 = ssub.s32 %s16, %s28
      %s51 = ssub.s32 %s17, %s24
      %s52 = sor.u32 %s50, %s51
      %p53 = scmp.eq.s32.totalorder %s52, 0
      %s55 = sadd.s32 %s54, 1
      %s56 = scalar_select %p53, %s54, %s55
      %p59 = pneg %p53
      %p60 = scmp.eq.s32.totalorder %s9, 1
      %p61 = por %p59, %p60
      %p62 = scmp.ne.s32.totalorder %s54, %s57
      %p63 = scmp.eq.s32.totalorder %s9, 0
      %p64 = por %p62, %p63
      %p65 = scmp.ne.s32.totalorder %s54, %s57
      %p66 = scmp.eq.s32.totalorder %s14, 1
      %p67 = por %p65, %p66
      %p68 = scmp.ne.s32.totalorder %s57, %s58
      %p69 = scmp.eq.s32.totalorder %s14, 0
      %p70 = por %p68, %p69
      %p71 = scmp.ne.s32.totalorder %s57, %s58
      %p72 = scmp.eq.s32.totalorder %s15, 1
      %p73 = por %p71, %p72
      %p75 = scmp.ne.s32.totalorder %s58, %s74
      %p76 = scmp.eq.s32.totalorder %s15, 0
      %p77 = por %p75, %p76
      %s78 = ssub.s32 %s16, %s28
      %s79 = ssub.s32 %s17, %s24
      %s80 = sor.u32 %s78, %s79
      %p81 = scmp.eq.s32.totalorder %s80, 0
      %s83 = sadd.s32 %s82, 1
      %s84 = scalar_select %p81, %s82, %s83
      %p87 = pneg %p81
      %p88 = scmp.eq.s32.totalorder %s9, 1
      %p89 = por %p87, %p88
      %p90 = scmp.ne.s32.totalorder %s82, %s85
      %p91 = scmp.eq.s32.totalorder %s9, 0
      %p92 = por %p90, %p91
      %p93 = scmp.ne.s32.totalorder %s82, %s85
      %p94 = scmp.eq.s32.totalorder %s14, 1
      %p95 = por %p93, %p94
      %p96 = scmp.ne.s32.totalorder %s85, %s86
      %p97 = scmp.eq.s32.totalorder %s14, 0
      %p98 = por %p96, %p97
      %p99 = scmp.ne.s32.totalorder %s85, %s86
      %p100 = scmp.eq.s32.totalorder %s15, 1
      %p101 = por %p99, %p100
      %p103 = scmp.ne.s32.totalorder %s86, %s102
      %p104 = scmp.eq.s32.totalorder %s15, 0
      %p105 = por %p103, %p104
      %p106 = scmp.le.s32.totalorder 1, %s9
      %p107 = scmp.lt.s32.totalorder %s9, 3
      %p108 = pnand %p106, %p107
      %p109 = pneg %p108
      // Predicated region
      $region9: #{self_sketch_pose_net_forward.2} parent=5 // pred_check
        _
      $region10: #{self_sketch_pose_net_forward.2} parent=5 // pred_check_branch
        %111 = sbr.rel (%p108) target = $region12
      $region11: #{self_sketch_pose_net_forward.2} parent=5 // pred_region
        %s112 = ssub.s32 %s9, 1
        // Predicated region
        $region13: #{self_sketch_pose_net_forward.2} parent=11 // pred_check
          %p113 = pneg %p42
        $region14: #{self_sketch_pose_net_forward.2} parent=11 // pred_check_branch
          %115 = sbr.rel (%p113) target = $region16
        $region15: #{self_sketch_pose_net_forward.2} parent=11 // pred_region
          %s117 = ssub.s32 16, 16
          %118 = vsyncadd [#allocation3], %s117
          %s120 = sshll.u32 %s0, 4
          %s121 = int_to_ptr.vmem [resolvable:$true] %s120
          %123 = dma.vmem_to_smem %s121, 16, [#allocation2], [#allocation3]
        $region16: #{self_sketch_pose_net_forward.2} parent=11 // pred_fallthru
          _
      $region12: #{self_sketch_pose_net_forward.2} parent=5 // pred_fallthru
        _
      %p124 = scmp.lt.s32.totalorder %s9, 2
      // Predicated region
      $region17: #{self_sketch_pose_net_forward.2} parent=5 // pred_check
        %p125 = pneg %p124
      $region18: #{self_sketch_pose_net_forward.2} parent=5 // pred_check_branch
        %127 = sbr.rel (%p125) target = $region20
      $region19: #{self_sketch_pose_net_forward.2} parent=5 // pred_region
        // Predicated region
        $region21: #{self_sketch_pose_net_forward.2} parent=19 // pred_check
          %p128 = pneg %p64
        $region22: #{self_sketch_pose_net_forward.2} parent=19 // pred_check_branch
          %130 = sbr.rel (%p128) target = $region24
        $region23: #{self_sketch_pose_net_forward.2} parent=19 // pred_region
          %p131 = scmp.lt.s32.totalorder %s16, 1
          %s132 = scalar_select %p131, %s16, 1
          %p133 = scmp.lt.s32.totalorder %s17, 0
          %s134 = scalar_select %p133, %s17, 0
          %s135 = smul.addr %s132, 3
          %s136 = sadd.s32 %s134, %s135
          %s137 = smul.addr %s136, 8
          %s138 = scalar_lea.vmem %s1, %s137
        $region24: #{self_sketch_pose_net_forward.2} parent=19 // pred_fallthru
          _
      $region20: #{self_sketch_pose_net_forward.2} parent=5 // pred_fallthru
        _
      %p139 = scmp.le.s32.totalorder 1, %s9
      %p140 = scmp.lt.s32.totalorder %s9, 3
      %p141 = pnand %p139, %p140
      %p142 = pneg %p141
      // Predicated region
      $region25: #{self_sketch_pose_net_forward.2} parent=5 // pred_check
        _
      $region26: #{self_sketch_pose_net_forward.2} parent=5 // pred_check_branch
        %144 = sbr.rel (%p141) target = $region28
      $region27: #{self_sketch_pose_net_forward.2} parent=5 // pred_region
        %s145 = ssub.s32 %s9, 1
        // Predicated region
        $region29: #{self_sketch_pose_net_forward.2} parent=27 // pred_check
          %p146 = pneg %p42
        $region30: #{self_sketch_pose_net_forward.2} parent=27 // pred_check_branch
          %148 = sbr.rel (%p146) target = $region32
        $region31: #{self_sketch_pose_net_forward.2} parent=27 // pred_region
          %149 = dma.done [#allocation3], 16
        $region32: #{self_sketch_pose_net_forward.2} parent=27 // pred_fallthru
          _
        %150 = sfence
        %p151 = pneg %p42
        %p152 = pneg %p39
        %p153 = scmp.lt.s32.totalorder %s18, 1
        %s154 = scalar_select %p153, %s18, 1
        %p155 = scmp.lt.s32.totalorder %s19, 0
        %s156 = scalar_select %p155, %s19, 0
        %s157 = smul.addr %s154, 3
        %s158 = sadd.s32 %s156, %s157
        %s159 = smul.addr %s158, 8
        %s160 = scalar_lea.vmem %s1, %s159
        %p161 = pneg %p70
        %p162 = pneg %p67
        %p163 = pneg %p98
        %p164 = pneg %p95
        %p165 = scmp.lt.s32.totalorder %s18, 1
        %s166 = scalar_select %p165, %s18, 1
        %p167 = scmp.lt.s32.totalorder %s19, 0
        %s168 = scalar_select %p167, %s19, 0
        %s169 = smul.addr %s166, 2
        %s170 = sadd.s32 %s168, %s169
        %s171 = smul.addr %s170, 8
        %s172 = scalar_lea.vmem %s2, %s171
        %p173 = scmp.lt.s32.totalorder %s18, 1
        %s174 = scalar_select %p173, %s18, 1
        %p175 = scmp.lt.s32.totalorder %s19, 0
        %s176 = scalar_select %p175, %s19, 0
        %s177 = smul.addr %s174, 3
        %s178 = sadd.s32 %s176, %s177
        %s179 = smul.addr %s178, 8
        %s180 = scalar_lea.vmem %s1, %s179
        %p181 = scmp.lt.s32.totalorder %s18, 1
        %s182 = scalar_select %p181, %s18, 1
        %p183 = scmp.lt.s32.totalorder %s19, 0
        %s184 = scalar_select %p183, %s19, 0
        %s185 = smul.addr %s182, 2
        %s186 = sadd.s32 %s184, %s185
        %s187 = smul.addr %s186, 8
        %s188 = scalar_lea.vmem %s2, %s187
        %v189 = vld [vmem:[%s180] sm:$0xff]
        %v190 = vld [vmem:[%s180 + $0x8] sm:$0xff]
        %v191 = vld [vmem:[%s180 + $0x10] sm:$0xff]
        %s192 = sld [smem:[#allocation2]]
        %v193 = vstv %s192
        %v194 = vmul.f32 %v193, %v189
        %s195 = sld [smem:[#allocation2 + $0x1]]
        %v196 = vstv %s195
        %v197 = vmul.f32 %v196, %v190
        %v198 = vadd.f32 %v194, %v197
        %s199 = sld [smem:[#allocation2 + $0x2]]
        %v200 = vstv %s199
        %v201 = vmul.f32 %v200, %v191
        %v202 = vadd.f32 %v198, %v201
        %s203 = sld [smem:[#allocation2 + $0x3]]
        %v204 = vstv %s203
        %v205 = vadd.f32 %v202, %v204
        %v206 = vsub.f32 0.0, %v205
        %v207 = vmul.f32 %v206, 1.442695
        %v208 = vpow.pop %v207
        %v209 = vadd.f32 %v208, 1.0
        %v210 = vrcp.pop %v209
        %v211 = vsub.f32 1.0, %v210
        %212 = vst [vmem:[%s188] sm:$0xff] %v211
        %s213 = scalar_lea.vmem %s188, 8
        %214 = vst [vmem:[%s213] sm:$0xff] %v210
        %p215 = scmp.lt.s32.totalorder %s18, 1
        %s216 = scalar_select %p215, %s18, 1
        %p217 = scmp.lt.s32.totalorder %s19, 0
        %s218 = scalar_select %p217, %s19, 0
        %s219 = smul.addr %s216, 2
        %s220 = sadd.s32 %s218, %s219
        %s221 = smul.addr %s220, 8
        %s222 = scalar_lea.vmem %s2, %s221
        // Predicated region
        $region33: #{self_sketch_pose_net_forward.2} parent=27 // pred_check
          %p223 = pneg %p95
        $region34: #{self_sketch_pose_net_forward.2} parent=27 // pred_check_branch
          %225 = sbr.rel (%p223) target = $region36
        $region35: #{self_sketch_pose_net_forward.2} parent=27 // pred_region
          _
        $region36: #{self_sketch_pose_net_forward.2} parent=27 // pred_fallthru
          _
      $region28: #{self_sketch_pose_net_forward.2} parent=5 // pred_fallthru
        _
      %p226 = scmp.le.s32.totalorder 2, %s9
      // Predicated region
      $region37: #{self_sketch_pose_net_forward.2} parent=5 // pred_check
        %p227 = pneg %p226
      $region38: #{self_sketch_pose_net_forward.2} parent=5 // pred_check_branch
        %229 = sbr.rel (%p227) target = $region40
      $region39: #{self_sketch_pose_net_forward.2} parent=5 // pred_region
        %s230 = ssub.s32 %s9, 2
        // Predicated region
        $region41: #{self_sketch_pose_net_forward.2} parent=39 // pred_check
          %p231 = pneg %p101
        $region42: #{self_sketch_pose_net_forward.2} parent=39 // pred_check_branch
          %233 = sbr.rel (%p231) target = $region44
        $region43: #{self_sketch_pose_net_forward.2} parent=39 // pred_region
          %p234 = scmp.lt.s32.totalorder %s20, 1
          %s235 = scalar_select %p234, %s20, 1
          %p236 = scmp.lt.s32.totalorder %s21, 0
          %s237 = scalar_select %p236, %s21, 0
          %s238 = smul.addr %s235, 2
          %s239 = sadd.s32 %s237, %s238
          %s240 = smul.addr %s239, 8
          %s241 = scalar_lea.vmem %s2, %s240
        $region44: #{self_sketch_pose_net_forward.2} parent=39 // pred_fallthru
          _
      $region40: #{self_sketch_pose_net_forward.2} parent=5 // pred_fallthru
        _
    $region6: #{self_sketch_pose_net_forward.2} parent=1 // loop_footer
      %s13 = sadd.s32 1, %s9
    $region7: #{self_sketch_pose_net_forward.2} parent=1 // loop_footer_branch
      %8 = sbr.rel target = $region3
    $region8: #{self_sketch_pose_net_forward.2} parent=1 // loop_exit
      _
    %242 = vsyncpa [#allocation3], 1
    %s243 = scalar_lea.sflag [#allocation3], 1
    %244 = vsyncpa %s243, 1

// kernel: self_sketch_pose_net_forward.3
$region0: #{self_sketch_pose_net_forward.3}
  #allocation0 [shape = 'u32[]', space=smem, size = 0x4, offset = 0x4, fixed_abs, tag = 'smem constant byte address 0x4 - core index']
  #allocation1 [shape = 'u32[144,128]{1,0:T(1,128)}', space=vmem, size = 0x12000, scoped, tag = 'internal scratch']
  %s0 = inlined_call_operand.vmem [shape: f32[1,8,256], index: 0, kind: input, shape index: {}]
  %s1 = inlined_call_operand.vmem [shape: f32[1,3,256], index: 1, kind: input, shape index: {}]
  %s2 = inlined_call_operand.vmem [shape: f32[160,3], index: 2, kind: input, shape index: {}]
  %s3 = inlined_call_operand.vmem [shape: f32[64,32], index: 3, kind: input, shape index: {}]
  %s4 = inlined_call_operand.vmem [shape: f32[152,64], index: 4, kind: input, shape index: {}]
  %s5 = inlined_call_operand.vmem [shape: f32[248,1], index: 5, kind: input, shape index: {}]
  %s6 = inlined_call_operand.vmem [shape: f32[1,16,2], index: 6, kind: output, shape index: {0}]
  %s7 = inlined_call_operand.vmem [shape: f32[1,3,256], index: 7, kind: output, shape index: {1}]
  %8 = xla_tuple %s6, %s7
  %s9 = sld [smem:[#allocation0]]
  $region42: #{self_sketch_pose_net_forward.3} parent=0
    _
  %s11 = ssub.s32 1, %s9
  %s12 = scalar_select 0, %s11, %s9
  // Predicated region
  $region2: #{self_sketch_pose_net_forward.3} parent=0 // pred_check
    _
  $region3: #{self_sketch_pose_net_forward.3} parent=0 // pred_check_branch
    %14 = sbr.rel (0) target = $region5
  $region4: #{self_sketch_pose_net_forward.3} parent=0 // pred_region
    _
  $region5: #{self_sketch_pose_net_forward.3} parent=0 // pred_fallthru
    _
  // Predicated region
  $region6: #{self_sketch_pose_net_forward.3} parent=0 // pred_check
    _
  $region7: #{self_sketch_pose_net_forward.3} parent=0 // pred_check_branch
    %16 = sbr.rel (0) target = $region9
  $region8: #{self_sketch_pose_net_forward.3} parent=0 // pred_region
    _
  $region9: #{self_sketch_pose_net_forward.3} parent=0 // pred_fallthru
    _
  // Predicated region
  $region10: #{self_sketch_pose_net_forward.3} parent=0 // pred_check
    _
  $region11: #{self_sketch_pose_net_forward.3} parent=0 // pred_check_branch
    %18 = sbr.rel (0) target = $region13
  $region12: #{self_sketch_pose_net_forward.3} parent=0 // pred_region
    _
  $region13: #{self_sketch_pose_net_forward.3} parent=0 // pred_fallthru
    _
  // Predicated region
  $region14: #{self_sketch_pose_net_forward.3} parent=0 // pred_check
    _
  $region15: #{self_sketch_pose_net_forward.3} parent=0 // pred_check_branch
    %20 = sbr.rel (0) target = $region17
  $region16: #{self_sketch_pose_net_forward.3} parent=0 // pred_region
    _
  $region17: #{self_sketch_pose_net_forward.3} parent=0 // pred_fallthru
    _
  // Predicated region
  $region18: #{self_sketch_pose_net_forward.3} parent=0 // pred_check
    _
  $region19: #{self_sketch_pose_net_forward.3} parent=0 // pred_check_branch
    %22 = sbr.rel (0) target = $region21
  $region20: #{self_sketch_pose_net_forward.3} parent=0 // pred_region
    _
  $region21: #{self_sketch_pose_net_forward.3} parent=0 // pred_fallthru
    _
  // Predicated region
  $region22: #{self_sketch_pose_net_forward.3} parent=0 // pred_check
    _
  $region23: #{self_sketch_pose_net_forward.3} parent=0 // pred_check_branch
    %24 = sbr.rel (0) target = $region25
  $region24: #{self_sketch_pose_net_forward.3} parent=0 // pred_region
    _
  $region25: #{self_sketch_pose_net_forward.3} parent=0 // pred_fallthru
    _
  %v25 = vld [vmem:[%s0] sm:$0xff]
  %v26 = vld [vmem:[%s0 + $0x8] sm:$0xff]
  %v27 = vld [vmem:[%s2] sm:$0xff]
  %v28 = vld [vmem:[%s2 + $0x8] sm:$0xff]
  %v29 = vld [vmem:[%s2 + $0x10] sm:$0xff]
  %v30 = vld [vmem:[%s2 + $0x18] sm:$0xff]
  %v31 = vld [vmem:[%s2 + $0x20] sm:$0xff]
  %v32 = vld [vmem:[%s2 + $0x28] sm:$0xff]
  %v33 = vld [vmem:[%s2 + $0x30] sm:$0xff]
  %v34 = vld [vmem:[%s2 + $0x38] sm:$0xff]
  %v35 = vld [vmem:[%s2 + $0x40] sm:$0xff]
  %v36 = vld [vmem:[%s2 + $0x48] sm:$0xff]
  %v37 = vld [vmem:[%s2 + $0x50] sm:$0xff]
  %v38 = vld [vmem:[%s2 + $0x58] sm:$0xff]
  %v39 = vld [vmem:[%s2 + $0x60] sm:$0xff]
  %v40 = vld [vmem:[%s2 + $0x68] sm:$0xff]
  %v41 = vld [vmem:[%s2 + $0x70] sm:$0xff]
  %v42 = vld [vmem:[%s2 + $0x78] sm:$0xff]
  %v43 = vld [vmem:[%s2 + $0x80] sm:$0xff]
  %v44 = vld [vmem:[%s2 + $0x88] sm:$0xff]
  %v45 = vld [vmem:[%s2 + $0x90] sm:$0xff]
  %v46 = vld [vmem:[%s2 + $0x98] sm:$0xff]
  %v47 = vld [vmem:[%s5] sm:$0xff]
  %v48 = vld [vmem:[%s5 + $0x8] sm:$0xff]
  %v49 = vld [vmem:[%s5 + $0x10] sm:$0xff]
  %v50 = vld [vmem:[%s5 + $0x18] sm:$0xff]
  %v51 = vld [vmem:[%s5 + $0x20] sm:$0xff]
  %v52 = vld [vmem:[%s5 + $0x28] sm:$0xff]
  %v53 = vld [vmem:[%s5 + $0x30] sm:$0xff]
  %v54 = vld [vmem:[%s5 + $0x38] sm:$0xff]
  %v55 = vld [vmem:[%s5 + $0x40] sm:$0xff]
  %v56 = vld [vmem:[%s5 + $0x48] sm:$0xff]
  %v57 = vld [vmem:[%s5 + $0x50] sm:$0xff]
  %v58 = vld [vmem:[%s5 + $0x58] sm:$0xff]
  %v59 = vld [vmem:[%s5 + $0x60] sm:$0xff]
  %v60 = vld [vmem:[%s5 + $0x68] sm:$0xff]
  %v61 = vld [vmem:[%s5 + $0x70] sm:$0xff]
  %v62 = vld [vmem:[%s5 + $0x78] sm:$0xff]
  %v63 = vld [vmem:[%s5 + $0x80] sm:$0xff]
  %v64 = vld [vmem:[%s5 + $0x88] sm:$0xff]
  %v65 = vld [vmem:[%s5 + $0x90] sm:$0xff]
  %v66 = vld [vmem:[%s5 + $0x98] sm:$0xff]
  %v67 = vld [vmem:[%s5 + $0xa0] sm:$0xff]
  %v68 = vld [vmem:[%s5 + $0xa8] sm:$0xff]
  %v69 = vld [vmem:[%s5 + $0xb0] sm:$0xff]
  %v70 = vld [vmem:[%s5 + $0xb8] sm:$0xff]
  %v71 = vld [vmem:[%s5 + $0xc0] sm:$0xff]
  %v72 = vld [vmem:[%s5 + $0xc8] sm:$0xff]
  %v73 = vld [vmem:[%s5 + $0xd0] sm:$0xff]
  %v74 = vld [vmem:[%s5 + $0xd8] sm:$0xff]
  %v75 = vld [vmem:[%s5 + $0xe0] sm:$0xff]
  %v76 = vld [vmem:[%s5 + $0xe8] sm:$0xff]
  %v77 = vld [vmem:[%s5 + $0xf0] sm:$0x7]
  %79 = vset.pattern.permute.xlu0 0
  %80 = vperm.xlu0 %79, %v27
  %v81 = vpop.permute.xlu0 %80
  %84 = vset.pattern.permute.xlu0 0
  %85 = vperm.xlu0 %84, %v28
  %v86 = vpop.permute.xlu0 %85
  %89 = vset.pattern.permute.xlu0 0
  %90 = vperm.xlu0 %89, %v29
  %v91 = vpop.permute.xlu0 %90
  %94 = vset.pattern.permute.xlu0 0
  %95 = vperm.xlu0 %94, %v30
  %v96 = vpop.permute.xlu0 %95
  %v98 = vlaneseq
  %v99 = vshrl.u32 %v98, 7
  %v100 = vsub.s32 0, %v99
  %v101 = vrot.slane %v25, %v100
  %v102 = vlaneseq
  %v103 = vshrl.u32 %v102, 7
  %v104 = vsub.s32 0, %v103
  %v105 = vrot.slane %v26, %v104
  %v106 = vmul.f32 %v81, %v101
  %v107 = vmul.f32 %v81, %v105
  %v108 = vmul.f32 %v86, %v101
  %v109 = vmul.f32 %v86, %v105
  %v110 = vmul.f32 %v91, %v101
  %v111 = vmul.f32 %v91, %v105
  %v112 = vmul.f32 %v96, %v101
  %v113 = vmul.f32 %v96, %v105
  %114 = vset.pattern.permute.xlu0 1
  %115 = vperm.xlu0 %114, %v27
  %v116 = vpop.permute.xlu0 %115
  %118 = vset.pattern.permute.xlu0 1
  %119 = vperm.xlu0 %118, %v28
  %v120 = vpop.permute.xlu0 %119
  %122 = vset.pattern.permute.xlu0 1
  %123 = vperm.xlu0 %122, %v29
  %v124 = vpop.permute.xlu0 %123
  %126 = vset.pattern.permute.xlu0 1
  %127 = vperm.xlu0 %126, %v30
  %v128 = vpop.permute.xlu0 %127
  %v130 = vlaneseq
  %v131 = vshrl.u32 %v130, 7
  %v132 = vsub.s32 1, %v131
  %v133 = vrot.slane %v25, %v132
  %v134 = vlaneseq
  %v135 = vshrl.u32 %v134, 7
  %v136 = vsub.s32 1, %v135
  %v137 = vrot.slane %v26, %v136
  %v138 = vmul.f32 %v116, %v133
  %v139 = vmul.f32 %v116, %v137
  %v140 = vmul.f32 %v120, %v133
  %v141 = vmul.f32 %v120, %v137
  %v142 = vmul.f32 %v124, %v133
  %v143 = vmul.f32 %v124, %v137
  %v144 = vmul.f32 %v128, %v133
  %v145 = vmul.f32 %v128, %v137
  %v146 = vadd.f32 %v106, %v138
  %v147 = vadd.f32 %v107, %v139
  %v148 = vadd.f32 %v108, %v140
  %v149 = vadd.f32 %v109, %v141
  %v150 = vadd.f32 %v110, %v142
  %v151 = vadd.f32 %v111, %v143
  %v152 = vadd.f32 %v112, %v144
  %v153 = vadd.f32 %v113, %v145
  %154 = vset.pattern.permute.xlu0 2
  %155 = vperm.xlu0 %154, %v27
  %v156 = vpop.permute.xlu0 %155
  %158 = vset.pattern.permute.xlu0 2
  %159 = vperm.xlu0 %158, %v28
  %v160 = vpop.permute.xlu0 %159
  %162 = vset.pattern.permute.xlu0 2
  %163 = vperm.xlu0 %162, %v29
  %v164 = vpop.permute.xlu0 %163
  %166 = vset.pattern.permute.xlu0 2
  %167 = vperm.xlu0 %166, %v30
  %v168 = vpop.permute.xlu0 %167
  %v170 = vlaneseq
  %v171 = vshrl.u32 %v170, 7
  %v172 = vsub.s32 2, %v171
  %v173 = vrot.slane %v25, %v172
  %v174 = vlaneseq
  %v175 = vshrl.u32 %v174, 7
  %v176 = vsub.s32 2, %v175
  %v177 = vrot.slane %v26, %v176
  %v178 = vmul.f32 %v156, %v173
  %v179 = vmul.f32 %v156, %v177
  %v180 = vmul.f32 %v160, %v173
  %v181 = vmul.f32 %v160, %v177
  %v182 = vmul.f32 %v164, %v173
  %v183 = vmul.f32 %v164, %v177
  %v184 = vmul.f32 %v168, %v173
  %v185 = vmul.f32 %v168, %v177
  %v186 = vadd.f32 %v146, %v178
  %v187 = vadd.f32 %v147, %v179
  %v188 = vadd.f32 %v148, %v180
  %v189 = vadd.f32 %v149, %v181
  %v190 = vadd.f32 %v150, %v182
  %v191 = vadd.f32 %v151, %v183
  %v192 = vadd.f32 %v152, %v184
  %v193 = vadd.f32 %v153, %v185
  %195 = vset.pattern.permute.xlu0 0
  %196 = vperm.xlu0 %195, %v47
  %v197 = vpop.permute.xlu0 %196
  %200 = vset.pattern.permute.xlu0 0
  %201 = vperm.xlu0 %200, %v48
  %v202 = vpop.permute.xlu0 %201
  %205 = vset.pattern.permute.xlu0 0
  %206 = vperm.xlu0 %205, %v49
  %v207 = vpop.permute.xlu0 %206
  %210 = vset.pattern.permute.xlu0 0
  %211 = vperm.xlu0 %210, %v50
  %v212 = vpop.permute.xlu0 %211
  %v214 = vadd.f32 %v186, %v197
  %v215 = vadd.f32 %v187, %v197
  %v216 = vadd.f32 %v188, %v202
  %v217 = vadd.f32 %v189, %v202
  %v218 = vadd.f32 %v190, %v207
  %v219 = vadd.f32 %v191, %v207
  %v220 = vadd.f32 %v192, %v212
  %v221 = vadd.f32 %v193, %v212
  %v224 = vrot.slane %v25, 7
  %v225 = vrot.slane %v26, 7
  %v228 = vmul.f32 %v25, %v224
  %v229 = vmul.f32 %v26, %v225
  %v230 = vrot.slane %v25, 6
  %v231 = vrot.slane %v26, 6
  %v234 = vmul.f32 %v25, %v230
  %v235 = vmul.f32 %v26, %v231
  %237 = vset.pattern.permute.xlu0 0
  %238 = vperm.xlu0 %237, %v31
  %v239 = vpop.permute.xlu0 %238
  %242 = vset.pattern.permute.xlu0 0
  %243 = vperm.xlu0 %242, %v32
  %v244 = vpop.permute.xlu0 %243
  %247 = vset.pattern.permute.xlu0 0
  %248 = vperm.xlu0 %247, %v33
  %v249 = vpop.permute.xlu0 %248
  %252 = vset.pattern.permute.xlu0 0
  %253 = vperm.xlu0 %252, %v34
  %v254 = vpop.permute.xlu0 %253
  %257 = vset.pattern.permute.xlu0 0
  %258 = vperm.xlu0 %257, %v35
  %v259 = vpop.permute.xlu0 %258
  %262 = vset.pattern.permute.xlu0 0
  %263 = vperm.xlu0 %262, %v36
  %v264 = vpop.permute.xlu0 %263
  %267 = vset.pattern.permute.xlu0 0
  %268 = vperm.xlu0 %267, %v37
  %v269 = vpop.permute.xlu0 %268
  %272 = vset.pattern.permute.xlu0 0
  %273 = vperm.xlu0 %272, %v38
  %v274 = vpop.permute.xlu0 %273
  %v276 = vlaneseq
  %v277 = vshrl.u32 %v276, 7
  %v278 = vsub.s32 4, %v277
  %v279 = vrot.slane %v228, %v278
  %v280 = vlaneseq
  %v281 = vshrl.u32 %v280, 7
  %v282 = vsub.s32 4, %v281
  %v283 = vrot.slane %v229, %v282
  %v284 = vmul.f32 %v239, %v279
  %v285 = vmul.f32 %v239, %v283
  %v286 = vmul.f32 %v244, %v279
  %v287 = vmul.f32 %v244, %v283
  %v288 = vmul.f32 %v249, %v279
  %v289 = vmul.f32 %v249, %v283
  %v290 = vmul.f32 %v254, %v279
  %v291 = vmul.f32 %v254, %v283
  %v292 = vmul.f32 %v259, %v279
  %v293 = vmul.f32 %v259, %v283
  %v294 = vmul.f32 %v264, %v279
  %v295 = vmul.f32 %v264, %v283
  %v296 = vmul.f32 %v269, %v279
  %v297 = vmul.f32 %v269, %v283
  %v298 = vmul.f32 %v274, %v279
  %v299 = vmul.f32 %v274, %v283
  %300 = vset.pattern.permute.xlu0 1
  %301 = vperm.xlu0 %300, %v31
  %v302 = vpop.permute.xlu0 %301
  %304 = vset.pattern.permute.xlu0 1
  %305 = vperm.xlu0 %304, %v32
  %v306 = vpop.permute.xlu0 %305
  %308 = vset.pattern.permute.xlu0 1
  %309 = vperm.xlu0 %308, %v33
  %v310 = vpop.permute.xlu0 %309
  %312 = vset.pattern.permute.xlu0 1
  %313 = vperm.xlu0 %312, %v34
  %v314 = vpop.permute.xlu0 %313
  %316 = vset.pattern.permute.xlu0 1
  %317 = vperm.xlu0 %316, %v35
  %v318 = vpop.permute.xlu0 %317
  %320 = vset.pattern.permute.xlu0 1
  %321 = vperm.xlu0 %320, %v36
  %v322 = vpop.permute.xlu0 %321
  %324 = vset.pattern.permute.xlu0 1
  %325 = vperm.xlu0 %324, %v37
  %v326 = vpop.permute.xlu0 %325
  %328 = vset.pattern.permute.xlu0 1
  %329 = vperm.xlu0 %328, %v38
  %v330 = vpop.permute.xlu0 %329
  %v332 = vlaneseq
  %v333 = vshrl.u32 %v332, 7
  %v334 = vsub.s32 5, %v333
  %v335 = vrot.slane %v234, %v334
  %v336 = vlaneseq
  %v337 = vshrl.u32 %v336, 7
  %v338 = vsub.s32 5, %v337
  %v339 = vrot.slane %v235, %v338
  %v340 = vmul.f32 %v302, %v335
  %v341 = vmul.f32 %v302, %v339
  %v342 = vmul.f32 %v306, %v335
  %v343 = vmul.f32 %v306, %v339
  %v344 = vmul.f32 %v310, %v335
  %v345 = vmul.f32 %v310, %v339
  %v346 = vmul.f32 %v314, %v335
  %v347 = vmul.f32 %v314, %v339
  %v348 = vmul.f32 %v318, %v335
  %v349 = vmul.f32 %v318, %v339
  %v350 = vmul.f32 %v322, %v335
  %v351 = vmul.f32 %v322, %v339
  %v352 = vmul.f32 %v326, %v335
  %v353 = vmul.f32 %v326, %v339
  %v354 = vmul.f32 %v330, %v335
  %v355 = vmul.f32 %v330, %v339
  %v356 = vadd.f32 %v284, %v340
  %v357 = vadd.f32 %v285, %v341
  %v358 = vadd.f32 %v286, %v342
  %v359 = vadd.f32 %v287, %v343
  %v360 = vadd.f32 %v288, %v344
  %v361 = vadd.f32 %v289, %v345
  %v362 = vadd.f32 %v290, %v346
  %v363 = vadd.f32 %v291, %v347
  %v364 = vadd.f32 %v292, %v348
  %v365 = vadd.f32 %v293, %v349
  %v366 = vadd.f32 %v294, %v350
  %v367 = vadd.f32 %v295, %v351
  %v368 = vadd.f32 %v296, %v352
  %v369 = vadd.f32 %v297, %v353
  %v370 = vadd.f32 %v298, %v354
  %v371 = vadd.f32 %v299, %v355
  %372 = vset.pattern.permute.xlu0 2
  %373 = vperm.xlu0 %372, %v31
  %v374 = vpop.permute.xlu0 %373
  %376 = vset.pattern.permute.xlu0 2
  %377 = vperm.xlu0 %376, %v32
  %v378 = vpop.permute.xlu0 %377
  %380 = vset.pattern.permute.xlu0 2
  %381 = vperm.xlu0 %380, %v33
  %v382 = vpop.permute.xlu0 %381
  %384 = vset.pattern.permute.xlu0 2
  %385 = vperm.xlu0 %384, %v34
  %v386 = vpop.permute.xlu0 %385
  %388 = vset.pattern.permute.xlu0 2
  %389 = vperm.xlu0 %388, %v35
  %v390 = vpop.permute.xlu0 %389
  %392 = vset.pattern.permute.xlu0 2
  %393 = vperm.xlu0 %392, %v36
  %v394 = vpop.permute.xlu0 %393
  %396 = vset.pattern.permute.xlu0 2
  %397 = vperm.xlu0 %396, %v37
  %v398 = vpop.permute.xlu0 %397
  %400 = vset.pattern.permute.xlu0 2
  %401 = vperm.xlu0 %400, %v38
  %v402 = vpop.permute.xlu0 %401
  %v404 = vlaneseq
  %v405 = vshrl.u32 %v404, 7
  %v406 = vsub.s32 3, %v405
  %v407 = vrot.slane %v25, %v406
  %v408 = vlaneseq
  %v409 = vshrl.u32 %v408, 7
  %v410 = vsub.s32 3, %v409
  %v411 = vrot.slane %v26, %v410
  %v412 = vmul.f32 %v374, %v407
  %v413 = vmul.f32 %v374, %v411
  %v414 = vmul.f32 %v378, %v407
  %v415 = vmul.f32 %v378, %v411
  %v416 = vmul.f32 %v382, %v407
  %v417 = vmul.f32 %v382, %v411
  %v418 = vmul.f32 %v386, %v407
  %v419 = vmul.f32 %v386, %v411
  %v420 = vmul.f32 %v390, %v407
  %v421 = vmul.f32 %v390, %v411
  %v422 = vmul.f32 %v394, %v407
  %v423 = vmul.f32 %v394, %v411
  %v424 = vmul.f32 %v398, %v407
  %v425 = vmul.f32 %v398, %v411
  %v426 = vmul.f32 %v402, %v407
  %v427 = vmul.f32 %v402, %v411
  %v428 = vadd.f32 %v356, %v412
  %v429 = vadd.f32 %v357, %v413
  %v430 = vadd.f32 %v358, %v414
  %v431 = vadd.f32 %v359, %v415
  %v432 = vadd.f32 %v360, %v416
  %v433 = vadd.f32 %v361, %v417
  %v434 = vadd.f32 %v362, %v418
  %v435 = vadd.f32 %v363, %v419
  %v436 = vadd.f32 %v364, %v420
  %v437 = vadd.f32 %v365, %v421
  %v438 = vadd.f32 %v366, %v422
  %v439 = vadd.f32 %v367, %v423
  %v440 = vadd.f32 %v368, %v424
  %v441 = vadd.f32 %v369, %v425
  %v442 = vadd.f32 %v370, %v426
  %v443 = vadd.f32 %v371, %v427
  %v444 = vld [vmem:[%s3] sm:$0xff]
  %v445 = vld [vmem:[%s3 + $0x8] sm:$0xff]
  %v446 = vld [vmem:[%s3 + $0x10] sm:$0xff]
  %v447 = vld [vmem:[%s3 + $0x18] sm:$0xff]
  %v448 = vld [vmem:[%s3 + $0x20] sm:$0xff]
  %v449 = vld [vmem:[%s3 + $0x28] sm:$0xff]
  %v450 = vld [vmem:[%s3 + $0x30] sm:$0xff]
  %v451 = vld [vmem:[%s3 + $0x38] sm:$0xff]
  %vm452 = vcmask 261120
  %v454 = vsel %vm452, %v444, 0
  %v457 = vsel %vm452, %v445, 0
  %v460 = vsel %vm452, %v446, 0
  %v463 = vsel %vm452, %v447, 0
  %v466 = vsel %vm452, %v448, 0
  %v469 = vsel %vm452, %v449, 0
  %v472 = vsel %vm452, %v450, 0
  %v475 = vsel %vm452, %v451, 0
  %477 = vmatprep.subr.mxu0 %v215
  %478 = vmatpush1.msra.mxu0 %v214
  %479 = vmatprep.subr.mxu0 %v217
  %480 = vmatpush1.msra.mxu0 %v216
  %481 = vmatprep.subr.mxu0 %v219
  %482 = vmatpush1.msra.mxu0 %v218
  %483 = vmatprep.subr.mxu0 %v221
  %484 = vmatpush1.msra.mxu0 %v220
  %485 = vmatprep.subr.mxu0 0.0
  %486 = vmatpush1.msra.mxu0 0.0
  %487 = vmatprep.subr.mxu0 0.0
  %488 = vmatpush1.msra.mxu0 0.0
  %489 = vmatprep.subr.mxu0 0.0
  %490 = vmatpush1.msra.mxu0 0.0
  %491 = vmatprep.subr.mxu0 0.0
  %492 = vmatpush1.msra.mxu0 0.0
  %493 = vmatprep.subr.mxu0 0.0
  %494 = vmatpush1.msra.mxu0 0.0
  %495 = vmatprep.subr.mxu0 0.0
  %496 = vmatpush1.msra.mxu0 0.0
  %497 = vmatprep.subr.mxu0 0.0
  %498 = vmatpush1.msra.mxu0 0.0
  %499 = vmatprep.subr.mxu0 0.0
  %500 = vmatpush1.msra.mxu0 0.0
  %501 = vmatprep.subr.mxu0 0.0
  %502 = vmatpush1.msra.mxu0 0.0
  %503 = vmatprep.subr.mxu0 0.0
  %504 = vmatpush1.msra.mxu0 0.0
  %505 = vmatprep.subr.mxu0 0.0
  %506 = vmatpush1.msra.mxu0 0.0
  %507 = vmatprep.subr.mxu0 0.0
  %508 = vmatpush1.msra.mxu0 0.0
  %509 = vmatprep.subr.mxu0 0.0
  %510 = vmatpush1.msra.mxu0 0.0
  %511 = vmatprep.subr.mxu0 0.0
  %512 = vmatpush1.msra.mxu0 0.0
  %513 = vmatprep.subr.mxu0 0.0
  %514 = vmatpush1.msra.mxu0 0.0
  %515 = vmatprep.subr.mxu0 0.0
  %516 = vmatpush1.msra.mxu0 0.0
  %517 = vmatprep.subr.mxu0 0.0
  %518 = vmatpush1.msra.mxu0 0.0
  %519 = vmatprep.subr.mxu0 0.0
  %520 = vmatpush1.msra.mxu0 0.0
  %521 = vmatprep.subr.mxu0 0.0
  %522 = vmatpush1.msra.mxu0 0.0
  %523 = vmatprep.subr.mxu0 0.0
  %524 = vmatpush1.msra.mxu0 0.0
  %525 = vmatprep.subr.mxu0 0.0
  %526 = vmatpush1.msra.mxu0 0.0
  %527 = vmatprep.subr.mxu0 0.0
  %528 = vmatpush1.msra.mxu0 0.0
  %529 = vmatprep.subr.mxu0 0.0
  %530 = vmatpush1.msra.mxu0 0.0
  %531 = vmatprep.subr.mxu0 0.0
  %532 = vmatpush1.msra.mxu0 0.0
  %533 = vmatprep.subr.mxu0 0.0
  %534 = vmatpush1.msra.mxu0 0.0
  %535 = vmatprep.subr.mxu0 0.0
  %536 = vmatpush1.msra.mxu0 0.0
  %537 = vmatprep.subr.mxu0 0.0
  %538 = vmatpush1.msra.mxu0 0.0
  %539 = vmatprep.subr.mxu0 0.0
  %540 = vmatpush1.msra.mxu0 0.0
  %541 = vmatprep.mubr.f32.mxu0 0.0
  %542 = vmatmul.mubr.f32.gmra.mrb[0].mxu0 %v454
  %v543 = vpop.f32.mrb[0].mxu0
  %v544 = vadd.f32 0.0, %v543
  %v545 = vpop.f32.mrb[0].mxu0
  %v546 = vadd.f32 0.0, %v545
  %547 = vmatprep.mubr.f32.mxu0 0.0
  %548 = vmatmul.mubr.f32.gmra.mrb[0].mxu0 %v457
  %v549 = vpop.f32.mrb[0].mxu0
  %v550 = vadd.f32 0.0, %v549
  %v551 = vpop.f32.mrb[0].mxu0
  %v552 = vadd.f32 0.0, %v551
  %553 = vmatprep.mubr.f32.mxu0 0.0
  %554 = vmatmul.mubr.f32.gmra.mrb[0].mxu0 %v460
  %v555 = vpop.f32.mrb[0].mxu0
  %v556 = vadd.f32 0.0, %v555
  %v557 = vpop.f32.mrb[0].mxu0
  %v558 = vadd.f32 0.0, %v557
  %559 = vmatprep.mubr.f32.mxu0 0.0
  %560 = vmatmul.mubr.f32.gmra.mrb[0].mxu0 %v463
  %v561 = vpop.f32.mrb[0].mxu0
  %v562 = vadd.f32 0.0, %v561
  %v563 = vpop.f32.mrb[0].mxu0
  %v564 = vadd.f32 0.0, %v563
  %565 = vmatprep.mubr.f32.mxu0 0.0
  %566 = vmatmul.mubr.f32.gmra.mrb[0].mxu0 %v466
  %v567 = vpop.f32.mrb[0].mxu0
  %v568 = vadd.f32 0.0, %v567
  %v569 = vpop.f32.mrb[0].mxu0
  %v570 = vadd.f32 0.0, %v569
  %571 = vmatprep.mubr.f32.mxu0 0.0
  %572 = vmatmul.mubr.f32.gmra.mrb[0].mxu0 %v469
  %v573 = vpop.f32.mrb[0].mxu0
  %v574 = vadd.f32 0.0, %v573
  %v575 = vpop.f32.mrb[0].mxu0
  %v576 = vadd.f32 0.0, %v575
  %577 = vmatprep.mubr.f32.mxu0 0.0
  %578 = vmatmul.mubr.f32.gmra.mrb[0].mxu0 %v472
  %v579 = vpop.f32.mrb[0].mxu0
  %v580 = vadd.f32 0.0, %v579
  %v581 = vpop.f32.mrb[0].mxu0
  %v582 = vadd.f32 0.0, %v581
  %583 = vmatprep.mubr.f32.mxu0 0.0
  %584 = vmatmul.mubr.f32.gmra.mrb[0].mxu0 %v475
  %v585 = vpop.f32.mrb[0].mxu0
  %v586 = vadd.f32 0.0, %v585
  %v587 = vpop.f32.mrb[0].mxu0
  %v588 = vadd.f32 0.0, %v587
  %589 = vdwg.mxu0
  %v590 = vadd.f32 %v428, %v544
  %v591 = vadd.f32 %v429, %v546
  %v592 = vadd.f32 %v430, %v550
  %v593 = vadd.f32 %v431, %v552
  %v594 = vadd.f32 %v432, %v556
  %v595 = vadd.f32 %v433, %v558
  %v596 = vadd.f32 %v434, %v562
  %v597 = vadd.f32 %v435, %v564
  %v598 = vadd.f32 %v436, %v568
  %v599 = vadd.f32 %v437, %v570
  %v600 = vadd.f32 %v438, %v574
  %v601 = vadd.f32 %v439, %v576
  %v602 = vadd.f32 %v440, %v580
  %v603 = vadd.f32 %v441, %v582
  %v604 = vadd.f32 %v442, %v586
  %v605 = vadd.f32 %v443, %v588
  %607 = vset.pattern.permute.xlu0 0
  %608 = vperm.xlu0 %607, %v51
  %v609 = vpop.permute.xlu0 %608
  %612 = vset.pattern.permute.xlu0 0
  %613 = vperm.xlu0 %612, %v52
  %v614 = vpop.permute.xlu0 %613
  %617 = vset.pattern.permute.xlu0 0
  %618 = vperm.xlu0 %617, %v53
  %v619 = vpop.permute.xlu0 %618
  %622 = vset.pattern.permute.xlu0 0
  %623 = vperm.xlu0 %622, %v54
  %v624 = vpop.permute.xlu0 %623
  %627 = vset.pattern.permute.xlu0 0
  %628 = vperm.xlu0 %627, %v55
  %v629 = vpop.permute.xlu0 %628
  %632 = vset.pattern.permute.xlu0 0
  %633 = vperm.xlu0 %632, %v56
  %v634 = vpop.permute.xlu0 %633
  %637 = vset.pattern.permute.xlu0 0
  %638 = vperm.xlu0 %637, %v57
  %v639 = vpop.permute.xlu0 %638
  %642 = vset.pattern.permute.xlu0 0
  %643 = vperm.xlu0 %642, %v58
  %v644 = vpop.permute.xlu0 %643
  %v646 = vadd.f32 %v590, %v609
  %v647 = vadd.f32 %v591, %v609
  %v648 = vadd.f32 %v592, %v614
  %v649 = vadd.f32 %v593, %v614
  %v650 = vadd.f32 %v594, %v619
  %v651 = vadd.f32 %v595, %v619
  %v652 = vadd.f32 %v596, %v624
  %v653 = vadd.f32 %v597, %v624
  %v654 = vadd.f32 %v598, %v629
  %v655 = vadd.f32 %v599, %v629
  %v656 = vadd.f32 %v600, %v634
  %v657 = vadd.f32 %v601, %v634
  %v658 = vadd.f32 %v602, %v639
  %v659 = vadd.f32 %v603, %v639
  %v660 = vadd.f32 %v604, %v644
  %v661 = vadd.f32 %v605, %v644
  %v662 = vmax.f32 %v646, 0.0
  %v663 = vmax.f32 %v647, 0.0
  %v664 = vmax.f32 %v648, 0.0
  %v665 = vmax.f32 %v649, 0.0
  %v666 = vmax.f32 %v650, 0.0
  %v667 = vmax.f32 %v651, 0.0
  %v668 = vmax.f32 %v652, 0.0
  %v669 = vmax.f32 %v653, 0.0
  %v670 = vmax.f32 %v654, 0.0
  %v671 = vmax.f32 %v655, 0.0
  %v672 = vmax.f32 %v656, 0.0
  %v673 = vmax.f32 %v657, 0.0
  %v674 = vmax.f32 %v658, 0.0
  %v675 = vmax.f32 %v659, 0.0
  %v676 = vmax.f32 %v660, 0.0
  %v677 = vmax.f32 %v661, 0.0
  %v678 = vld [vmem:[%s4] sm:$0xff]
  %v679 = vld [vmem:[%s4 + $0x8] sm:$0xff]
  %v680 = vld [vmem:[%s4 + $0x10] sm:$0xff]
  %v681 = vld [vmem:[%s4 + $0x18] sm:$0xff]
  %v682 = vld [vmem:[%s4 + $0x20] sm:$0xff]
  %v683 = vld [vmem:[%s4 + $0x28] sm:$0xff]
  %v684 = vld [vmem:[%s4 + $0x30] sm:$0xff]
  %v685 = vld [vmem:[%s4 + $0x38] sm:$0xff]
  %687 = vset.pattern.permute.xlu0 0
  %688 = vperm.xlu0 %687, %v59
  %v689 = vpop.permute.xlu0 %688
  %692 = vset.pattern.permute.xlu0 0
  %693 = vperm.xlu0 %692, %v60
  %v694 = vpop.permute.xlu0 %693
  %697 = vset.pattern.permute.xlu0 0
  %698 = vperm.xlu0 %697, %v61
  %v699 = vpop.permute.xlu0 %698
  %702 = vset.pattern.permute.xlu0 0
  %703 = vperm.xlu0 %702, %v62
  %v704 = vpop.permute.xlu0 %703
  %707 = vset.pattern.permute.xlu0 0
  %708 = vperm.xlu0 %707, %v63
  %v709 = vpop.permute.xlu0 %708
  %712 = vset.pattern.permute.xlu0 0
  %713 = vperm.xlu0 %712, %v64
  %v714 = vpop.permute.xlu0 %713
  %717 = vset.pattern.permute.xlu0 0
  %718 = vperm.xlu0 %717, %v65
  %v719 = vpop.permute.xlu0 %718
  %722 = vset.pattern.permute.xlu0 0
  %723 = vperm.xlu0 %722, %v66
  %v724 = vpop.permute.xlu0 %723
  %vm726 = vcmask 523264
  %v728 = vsel %vm726, %v678, 0
  %v731 = vsel %vm726, %v679, 0
  %v734 = vsel %vm726, %v680, 0
  %v737 = vsel %vm726, %v681, 0
  %v740 = vsel %vm726, %v682, 0
  %v743 = vsel %vm726, %v683, 0
  %v746 = vsel %vm726, %v684, 0
  %v749 = vsel %vm726, %v685, 0
  %751 = vmatprep.subr.mxu0 %v663
  %752 = vmatpush1.msra.mxu0 %v662
  %753 = vmatprep.subr.mxu0 %v665
  %754 = vmatpush1.msra.mxu0 %v664
  %755 = vmatprep.subr.mxu0 %v667
  %756 = vmatpush1.msra.mxu0 %v666
  %757 = vmatprep.subr.mxu0 %v669
  %758 = vmatpush1.msra.mxu0 %v668
  %759 = vmatprep.subr.mxu0 %v671
  %760 = vmatpush1.msra.mxu0 %v670
  %761 = vmatprep.subr.mxu0 %v673
  %762 = vmatpush1.msra.mxu0 %v672
  %763 = vmatprep.subr.mxu0 %v675
  %764 = vmatpush1.msra.mxu0 %v674
  %765 = vmatprep.subr.mxu0 %v677
  %766 = vmatpush1.msra.mxu0 %v676
  %767 = vmatprep.subr.mxu0 0.0
  %768 = vmatpush1.msra.mxu0 0.0
  %769 = vmatprep.subr.mxu0 0.0
  %770 = vmatpush1.msra.mxu0 0.0
  %771 = vmatprep.subr.mxu0 0.0
  %772 = vmatpush1.msra.mxu0 0.0
  %773 = vmatprep.subr.mxu0 0.0
  %774 = vmatpush1.msra.mxu0 0.0
  %775 = vmatprep.subr.mxu0 0.0
  %776 = vmatpush1.msra.mxu0 0.0
  %777 = vmatprep.subr.mxu0 0.0
  %778 = vmatpush1.msra.mxu0 0.0
  %779 = vmatprep.subr.mxu0 0.0
  %780 = vmatpush1.msra.mxu0 0.0
  %781 = vmatprep.subr.mxu0 0.0
  %782 = vmatpush1.msra.mxu0 0.0
  %783 = vmatprep.subr.mxu0 0.0
  %784 = vmatpush1.msra.mxu0 0.0
  %785 = vmatprep.subr.mxu0 0.0
  %786 = vmatpush1.msra.mxu0 0.0
  %787 = vmatprep.subr.mxu0 0.0
  %788 = vmatpush1.msra.mxu0 0.0
  %789 = vmatprep.subr.mxu0 0.0
  %790 = vmatpush1.msra.mxu0 0.0
  %791 = vmatprep.subr.mxu0 0.0
  %792 = vmatpush1.msra.mxu0 0.0
  %793 = vmatprep.subr.mxu0 0.0
  %794 = vmatpush1.msra.mxu0 0.0
  %795 = vmatprep.subr.mxu0 0.0
  %796 = vmatpush1.msra.mxu0 0.0
  %797 = vmatprep.subr.mxu0 0.0
  %798 = vmatpush1.msra.mxu0 0.0
  %799 = vmatprep.subr.mxu0 0.0
  %800 = vmatpush1.msra.mxu0 0.0
  %801 = vmatprep.subr.mxu0 0.0
  %802 = vmatpush1.msra.mxu0 0.0
  %803 = vmatprep.subr.mxu0 0.0
  %804 = vmatpush1.msra.mxu0 0.0
  %805 = vmatprep.subr.mxu0 0.0
  %806 = vmatpush1.msra.mxu0 0.0
  %807 = vmatprep.subr.mxu0 0.0
  %808 = vmatpush1.msra.mxu0 0.0
  %809 = vmatprep.subr.mxu0 0.0
  %810 = vmatpush1.msra.mxu0 0.0
  %811 = vmatprep.subr.mxu0 0.0
  %812 = vmatpush1.msra.mxu0 0.0
  %813 = vmatprep.subr.mxu0 0.0
  %814 = vmatpush1.msra.mxu0 0.0
  %815 = vmatprep.mubr.f32.mxu0 0.0
  %816 = vmatmul.mubr.f32.gmra.mrb[0].mxu0 %v728
  %v817 = vpop.f32.mrb[0].mxu0
  %v818 = vadd.f32 %v689, %v817
  %v819 = vpop.f32.mrb[0].mxu0
  %v820 = vadd.f32 %v689, %v819
  %821 = vmatprep.mubr.f32.mxu0 0.0
  %822 = vmatmul.mubr.f32.gmra.mrb[0].mxu0 %v731
  %v823 = vpop.f32.mrb[0].mxu0
  %v824 = vadd.f32 %v694, %v823
  %v825 = vpop.f32.mrb[0].mxu0
  %v826 = vadd.f32 %v694, %v825
  %827 = vmatprep.mubr.f32.mxu0 0.0
  %828 = vmatmul.mubr.f32.gmra.mrb[0].mxu0 %v734
  %v829 = vpop.f32.mrb[0].mxu0
  %v830 = vadd.f32 %v699, %v829
  %v831 = vpop.f32.mrb[0].mxu0
  %v832 = vadd.f32 %v699, %v831
  %833 = vmatprep.mubr.f32.mxu0 0.0
  %834 = vmatmul.mubr.f32.gmra.mrb[0].mxu0 %v737
  %v835 = vpop.f32.mrb[0].mxu0
  %v836 = vadd.f32 %v704, %v835
  %v837 = vpop.f32.mrb[0].mxu0
  %v838 = vadd.f32 %v704, %v837
  %839 = vmatprep.mubr.f32.mxu0 0.0
  %840 = vmatmul.mubr.f32.gmra.mrb[0].mxu0 %v740
  %v841 = vpop.f32.mrb[0].mxu0
  %v842 = vadd.f32 %v709, %v841
  %v843 = vpop.f32.mrb[0].mxu0
  %v844 = vadd.f32 %v709, %v843
  %845 = vmatprep.mubr.f32.mxu0 0.0
  %846 = vmatmul.mubr.f32.gmra.mrb[0].mxu0 %v743
  %v847 = vpop.f32.mrb[0].mxu0
  %v848 = vadd.f32 %v714, %v847
  %v849 = vpop.f32.mrb[0].mxu0
  %v850 = vadd.f32 %v714, %v849
  %851 = vmatprep.mubr.f32.mxu0 0.0
  %852 = vmatmul.mubr.f32.gmra.mrb[0].mxu0 %v746
  %v853 = vpop.f32.mrb[0].mxu0
  %v854 = vadd.f32 %v719, %v853
  %v855 = vpop.f32.mrb[0].mxu0
  %v856 = vadd.f32 %v719, %v855
  %857 = vmatprep.mubr.f32.mxu0 0.0
  %858 = vmatmul.mubr.f32.gmra.mrb[0].mxu0 %v749
  %v859 = vpop.f32.mrb[0].mxu0
  %v860 = vadd.f32 %v724, %v859
  %v861 = vpop.f32.mrb[0].mxu0
  %v862 = vadd.f32 %v724, %v861
  %863 = vdwg.mxu0
  %v864 = vmax.f32 %v818, 0.0
  %v865 = vmax.f32 %v820, 0.0
  %v866 = vmax.f32 %v824, 0.0
  %v867 = vmax.f32 %v826, 0.0
  %v868 = vmax.f32 %v830, 0.0
  %v869 = vmax.f32 %v832, 0.0
  %v870 = vmax.f32 %v836, 0.0
  %v871 = vmax.f32 %v838, 0.0
  %v872 = vmax.f32 %v842, 0.0
  %v873 = vmax.f32 %v844, 0.0
  %v874 = vmax.f32 %v848, 0.0
  %v875 = vmax.f32 %v850, 0.0
  %v876 = vmax.f32 %v854, 0.0
  %v877 = vmax.f32 %v856, 0.0
  %v878 = vmax.f32 %v860, 0.0
  %v879 = vmax.f32 %v862, 0.0
  %880 = vmax.xlane.f32.xlu0 %v864
  %v881 = vpop.xlane.xlu0 %880
  %882 = vmax.xlane.f32.xlu0 %v866
  %v883 = vpop.xlane.xlu0 %882
  %884 = vmax.xlane.f32.xlu0 %v868
  %v885 = vpop.xlane.xlu0 %884
  %886 = vmax.xlane.f32.xlu0 %v870
  %v887 = vpop.xlane.xlu0 %886
  %888 = vmax.xlane.f32.xlu0 %v872
  %v889 = vpop.xlane.xlu0 %888
  %890 = vmax.xlane.f32.xlu0 %v874
  %v891 = vpop.xlane.xlu0 %890
  %892 = vmax.xlane.f32.xlu0 %v876
  %v893 = vpop.xlane.xlu0 %892
  %894 = vmax.xlane.f32.xlu0 %v878
  %v895 = vpop.xlane.xlu0 %894
  %896 = vmax.xlane.f32.xlu0 %v865
  %v897 = vpop.xlane.xlu0 %896
  %898 = vmax.xlane.f32.xlu0 %v867
  %v899 = vpop.xlane.xlu0 %898
  %900 = vmax.xlane.f32.xlu0 %v869
  %v901 = vpop.xlane.xlu0 %900
  %902 = vmax.xlane.f32.xlu0 %v871
  %v903 = vpop.xlane.xlu0 %902
  %904 = vmax.xlane.f32.xlu0 %v873
  %v905 = vpop.xlane.xlu0 %904
  %906 = vmax.xlane.f32.xlu0 %v875
  %v907 = vpop.xlane.xlu0 %906
  %908 = vmax.xlane.f32.xlu0 %v877
  %v909 = vpop.xlane.xlu0 %908
  %910 = vmax.xlane.f32.xlu0 %v879
  %v911 = vpop.xlane.xlu0 %910
  %vm912 = vcmask 7168
  %v913 = vsel %vm912, %v881, %v897
  %v914 = vsel %vm912, %v883, %v899
  %v915 = vsel %vm912, %v885, %v901
  %v916 = vsel %vm912, %v887, %v903
  %v917 = vsel %vm912, %v889, %v905
  %v918 = vsel %vm912, %v891, %v907
  %v919 = vsel %vm912, %v893, %v909
  %v920 = vsel %vm912, %v895, %v911
  %v921 = vld [vmem:[%s4 + $0x40] sm:$0xff]
  %v922 = vld [vmem:[%s4 + $0x48] sm:$0xff]
  %v923 = vld [vmem:[%s4 + $0x50] sm:$0xff]
  %v924 = vld [vmem:[%s4 + $0x58] sm:$0xff]
  %v925 = vld [vmem:[%s4 + $0x60] sm:$0xff]
  %v926 = vld [vmem:[%s4 + $0x68] sm:$0xff]
  %v927 = vld [vmem:[%s4 + $0x70] sm:$0xff]
  %v928 = vld [vmem:[%s4 + $0x78] sm:$0xff]
  %v929 = vld [vmem:[%s4 + $0x80] sm:$0xff]
  %v930 = vld [vmem:[%s4 + $0x88] sm:$0xff]
  %932 = vset.pattern.permute.xlu0 0
  %933 = vperm.xlu0 %932, %v67
  %v934 = vpop.permute.xlu0 %933
  %937 = vset.pattern.permute.xlu0 0
  %938 = vperm.xlu0 %937, %v68
  %v939 = vpop.permute.xlu0 %938
  %942 = vset.pattern.permute.xlu0 0
  %943 = vperm.xlu0 %942, %v69
  %v944 = vpop.permute.xlu0 %943
  %947 = vset.pattern.permute.xlu0 0
  %948 = vperm.xlu0 %947, %v70
  %v949 = vpop.permute.xlu0 %948
  %952 = vset.pattern.permute.xlu0 0
  %953 = vperm.xlu0 %952, %v71
  %v954 = vpop.permute.xlu0 %953
  %957 = vset.pattern.permute.xlu0 0
  %958 = vperm.xlu0 %957, %v72
  %v959 = vpop.permute.xlu0 %958
  %962 = vset.pattern.permute.xlu0 0
  %963 = vperm.xlu0 %962, %v73
  %v964 = vpop.permute.xlu0 %963
  %967 = vset.pattern.permute.xlu0 0
  %968 = vperm.xlu0 %967, %v74
  %v969 = vpop.permute.xlu0 %968
  %972 = vset.pattern.permute.xlu0 0
  %973 = vperm.xlu0 %972, %v75
  %v974 = vpop.permute.xlu0 %973
  %977 = vset.pattern.permute.xlu0 0
  %978 = vperm.xlu0 %977, %v76
  %v979 = vpop.permute.xlu0 %978
  %v982 = vsel %vm726, %v921, 0
  %v985 = vsel %vm726, %v922, 0
  %v988 = vsel %vm726, %v923, 0
  %v991 = vsel %vm726, %v924, 0
  %v994 = vsel %vm726, %v925, 0
  %v997 = vsel %vm726, %v926, 0
  %v1000 = vsel %vm726, %v927, 0
  %v1003 = vsel %vm726, %v928, 0
  %v1006 = vsel %vm726, %v929, 0
  %v1009 = vsel %vm726, %v930, 0
  %1011 = vmatprep.subr.mxu0 0.0
  %1012 = vmatpush1.msra.mxu0 %v913
  %1013 = vmatprep.subr.mxu0 0.0
  %1014 = vmatpush1.msra.mxu0 %v914
  %1015 = vmatprep.subr.mxu0 0.0
  %1016 = vmatpush1.msra.mxu0 %v915
  %1017 = vmatprep.subr.mxu0 0.0
  %1018 = vmatpush1.msra.mxu0 %v916
  %1019 = vmatprep.subr.mxu0 0.0
  %1020 = vmatpush1.msra.mxu0 %v917
  %1021 = vmatprep.subr.mxu0 0.0
  %1022 = vmatpush1.msra.mxu0 %v918
  %1023 = vmatprep.subr.mxu0 0.0
  %1024 = vmatpush1.msra.mxu0 %v919
  %1025 = vmatprep.subr.mxu0 0.0
  %1026 = vmatpush1.msra.mxu0 %v920
  %1027 = vmatprep.subr.mxu0 0.0
  %1028 = vmatpush1.msra.mxu0 0.0
  %1029 = vmatprep.subr.mxu0 0.0
  %1030 = vmatpush1.msra.mxu0 0.0
  %1031 = vmatprep.subr.mxu0 0.0
  %1032 = vmatpush1.msra.mxu0 0.0
  %1033 = vmatprep.subr.mxu0 0.0
  %1034 = vmatpush1.msra.mxu0 0.0
  %1035 = vmatprep.subr.mxu0 0.0
  %1036 = vmatpush1.msra.mxu0 0.0
  %1037 = vmatprep.subr.mxu0 0.0
  %1038 = vmatpush1.msra.mxu0 0.0
  %1039 = vmatprep.subr.mxu0 0.0
  %1040 = vmatpush1.msra.mxu0 0.0
  %1041 = vmatprep.subr.mxu0 0.0
  %1042 = vmatpush1.msra.mxu0 0.0
  %1043 = vmatprep.subr.mxu0 0.0
  %1044 = vmatpush1.msra.mxu0 0.0
  %1045 = vmatprep.subr.mxu0 0.0
  %1046 = vmatpush1.msra.mxu0 0.0
  %1047 = vmatprep.subr.mxu0 0.0
  %1048 = vmatpush1.msra.mxu0 0.0
  %1049 = vmatprep.subr.mxu0 0.0
  %1050 = vmatpush1.msra.mxu0 0.0
  %1051 = vmatprep.subr.mxu0 0.0
  %1052 = vmatpush1.msra.mxu0 0.0
  %1053 = vmatprep.subr.mxu0 0.0
  %1054 = vmatpush1.msra.mxu0 0.0
  %1055 = vmatprep.subr.mxu0 0.0
  %1056 = vmatpush1.msra.mxu0 0.0
  %1057 = vmatprep.subr.mxu0 0.0
  %1058 = vmatpush1.msra.mxu0 0.0
  %1059 = vmatprep.subr.mxu0 0.0
  %1060 = vmatpush1.msra.mxu0 0.0
  %1061 = vmatprep.subr.mxu0 0.0
  %1062 = vmatpush1.msra.mxu0 0.0
  %1063 = vmatprep.subr.mxu0 0.0
  %1064 = vmatpush1.msra.mxu0 0.0
  %1065 = vmatprep.subr.mxu0 0.0
  %1066 = vmatpush1.msra.mxu0 0.0
  %1067 = vmatprep.subr.mxu0 0.0
  %1068 = vmatpush1.msra.mxu0 0.0
  %1069 = vmatprep.subr.mxu0 0.0
  %1070 = vmatpush1.msra.mxu0 0.0
  %1071 = vmatprep.subr.mxu0 0.0
  %1072 = vmatpush1.msra.mxu0 0.0
  %1073 = vmatprep.subr.mxu0 0.0
  %1074 = vmatpush1.msra.mxu0 0.0
  %1075 = vmatprep.mubr.f32.mxu0 0.0
  %1076 = vmatmul.mubr.f32.gmra.mrb[0].mxu0 %v982
  %v1077 = vpop.f32.mrb[0].mxu0
  %v1078 = vadd.f32 %v934, %v1077
  %v1079 = vpop.f32.mrb[0].mxu0
  %1080 = vmatprep.mubr.f32.mxu0 0.0
  %1081 = vmatmul.mubr.f32.gmra.mrb[0].mxu0 %v985
  %v1082 = vpop.f32.mrb[0].mxu0
  %v1083 = vadd.f32 %v939, %v1082
  %v1084 = vpop.f32.mrb[0].mxu0
  %1085 = vmatprep.mubr.f32.mxu0 0.0
  %1086 = vmatmul.mubr.f32.gmra.mrb[0].mxu0 %v988
  %v1087 = vpop.f32.mrb[0].mxu0
  %v1088 = vadd.f32 %v944, %v1087
  %v1089 = vpop.f32.mrb[0].mxu0
  %1090 = vmatprep.mubr.f32.mxu0 0.0
  %1091 = vmatmul.mubr.f32.gmra.mrb[0].mxu0 %v991
  %v1092 = vpop.f32.mrb[0].mxu0
  %v1093 = vadd.f32 %v949, %v1092
  %v1094 = vpop.f32.mrb[0].mxu0
  %1095 = vmatprep.mubr.f32.mxu0 0.0
  %1096 = vmatmul.mubr.f32.gmra.mrb[0].mxu0 %v994
  %v1097 = vpop.f32.mrb[0].mxu0
  %v1098 = vadd.f32 %v954, %v1097
  %v1099 = vpop.f32.mrb[0].mxu0
  %1100 = vmatprep.mubr.f32.mxu0 0.0
  %1101 = vmatmul.mubr.f32.gmra.mrb[0].mxu0 %v997
  %v1102 = vpop.f32.mrb[0].mxu0
  %v1103 = vadd.f32 %v959, %v1102
  %v1104 = vpop.f32.mrb[0].mxu0
  %1105 = vmatprep.mubr.f32.mxu0 0.0
  %1106 = vmatmul.mubr.f32.gmra.mrb[0].mxu0 %v1000
  %v1107 = vpop.f32.mrb[0].mxu0
  %v1108 = vadd.f32 %v964, %v1107
  %v1109 = vpop.f32.mrb[0].mxu0
  %1110 = vmatprep.mubr.f32.mxu0 0.0
  %1111 = vmatmul.mubr.f32.gmra.mrb[0].mxu0 %v1003
  %v1112 = vpop.f32.mrb[0].mxu0
  %v1113 = vadd.f32 %v969, %v1112
  %v1114 = vpop.f32.mrb[0].mxu0
  %1115 = vmatprep.mubr.f32.mxu0 0.0
  %1116 = vmatmul.mubr.f32.gmra.mrb[0].mxu0 %v1006
  %v1117 = vpop.f32.mrb[0].mxu0
  %v1118 = vadd.f32 %v974, %v1117
  %v1119 = vpop.f32.mrb[0].mxu0
  %1120 = vmatprep.mubr.f32.mxu0 0.0
  %1121 = vmatmul.mubr.f32.gmra.mrb[0].mxu0 %v1009
  %v1122 = vpop.f32.mrb[0].mxu0
  %v1123 = vadd.f32 %v979, %v1122
  %v1124 = vpop.f32.mrb[0].mxu0
  %1125 = vdwg.mxu0
  %v1126 = vmul.f32 %v1078, %v1078
  %vm1127 = vcmask 10240
  %v1128 = vsel %vm1127, %v1126, 0.0
  %v1129 = vrot.slane %v1128, 4
  %v1130 = vadd.f32 %v1128, %v1129
  %v1131 = vrot.slane %v1130, 2
  %v1132 = vadd.f32 %v1130, %v1131
  %v1133 = vrot.slane %v1132, 1
  %v1134 = vadd.f32 %v1132, %v1133
  %v1135 = vadd.f32 %v1134, 1e-08
  %v1136 = vrsqrt.pop %v1135
  %v1138 = vrot.slane %v1126, 3
  %v1140 = vsel %vm1127, %v1138, 0.0
  %v1141 = vrot.slane %v1140, 4
  %v1142 = vadd.f32 %v1140, %v1141
  %v1143 = vrot.slane %v1142, 2
  %v1144 = vadd.f32 %v1142, %v1143
  %v1145 = vrot.slane %v1144, 1
  %v1146 = vadd.f32 %v1144, %v1145
  %v1147 = vadd.f32 %v1146, 1e-08
  %v1148 = vrsqrt.pop %v1147
  %v1149 = vlaneseq
  %v1150 = vshrl.u32 %v1149, 7
  %v1151 = vadd.s32 %v1150, 8
  %vm1152 = vcmp.lt.s32.totalorder %v1150, 3
  %vm1153 = vcmp.lt.s32.totalorder %v1151, 3
  %vm1154 = vcmp.lt.s32.totalorder %v1150, 6
  %vm1155 = vcmp.lt.s32.totalorder %v1151, 6
  %v1156 = vsel %vm1154, %v1148, 1.0
  %v1157 = vsel %vm1155, %v1148, 1.0
  %v1158 = vsel %vm1152, %v1136, %v1156
  %v1159 = vsel %vm1153, %v1136, %v1157
  %v1160 = vsub.f32 0.0, %v1078
  %v1161 = vsub.f32 0.0, %v1083
  %v1162 = vmul.f32 %v1160, 1.442695
  %v1163 = vpow.pop %v1162
  %v1164 = vmul.f32 %v1161, 1.442695
  %v1165 = vpow.pop %v1164
  %v1166 = vadd.f32 %v1163, 1.0
  %v1167 = vadd.f32 %v1165, 1.0
  %v1168 = vrcp.pop %v1166
  %v1169 = vrcp.pop %v1167
  %vm1170 = vcmp.ge.s32.totalorder %v1150, 6
  %vm1171 = vcmp.ge.s32.totalorder %v1151, 6
  %vm1172 = vcmp.lt.s32.totalorder %v1150, 8
  %vm1173 = vcmp.lt.s32.totalorder %v1151, 8
  %vm1174 = vmand %vm1170, %vm1172
  %vm1175 = vmand %vm1171, %vm1173
  %v1176 = vmul.f32 %v1078, %v1158
  %v1177 = vmul.f32 %v1083, %v1159
  %v1178 = vsel %vm1174, %v1168, %v1176
  %v1179 = vsel %vm1175, %v1169, %v1177
  %vm1180 = vcmask 15360
  %1181 = vst.msk [vmem:[%s6] sm:$0xff] %vm1180, %v1178
  %1182 = vst.msk [vmem:[%s6 + $0x8] sm:$0xff] %vm1180, %v1179
  %v1183 = vld [vmem:[%s1] sm:$0x77]
  %1185 = vset.pattern.permute.xlu0 0
  %1186 = vperm.xlu0 %1185, %v1088
  %v1187 = vpop.permute.xlu0 %1186
  %1190 = vset.pattern.permute.xlu0 0
  %1191 = vperm.xlu0 %1190, %v1093
  %v1192 = vpop.permute.xlu0 %1191
  %1195 = vset.pattern.permute.xlu0 0
  %1196 = vperm.xlu0 %1195, %v1098
  %v1197 = vpop.permute.xlu0 %1196
  %1200 = vset.pattern.permute.xlu0 0
  %1201 = vperm.xlu0 %1200, %v1103
  %v1202 = vpop.permute.xlu0 %1201
  %1205 = vset.pattern.permute.xlu0 0
  %1206 = vperm.xlu0 %1205, %v1108
  %v1207 = vpop.permute.xlu0 %1206
  %1210 = vset.pattern.permute.xlu0 0
  %1211 = vperm.xlu0 %1210, %v1113
  %v1212 = vpop.permute.xlu0 %1211
  %1215 = vset.pattern.permute.xlu0 0
  %1216 = vperm.xlu0 %1215, %v1118
  %v1217 = vpop.permute.xlu0 %1216
  %1220 = vset.pattern.permute.xlu0 0
  %1221 = vperm.xlu0 %1220, %v1123
  %v1222 = vpop.permute.xlu0 %1221
  %1224 = vset.pattern.permute.xlu0 1
  %1225 = vperm.xlu0 %1224, %v1088
  %v1226 = vpop.permute.xlu0 %1225
  %1228 = vset.pattern.permute.xlu0 1
  %1229 = vperm.xlu0 %1228, %v1093
  %v1230 = vpop.permute.xlu0 %1229
  %1232 = vset.pattern.permute.xlu0 1
  %1233 = vperm.xlu0 %1232, %v1098
  %v1234 = vpop.permute.xlu0 %1233
  %1236 = vset.pattern.permute.xlu0 1
  %1237 = vperm.xlu0 %1236, %v1103
  %v1238 = vpop.permute.xlu0 %1237
  %1240 = vset.pattern.permute.xlu0 1
  %1241 = vperm.xlu0 %1240, %v1108
  %v1242 = vpop.permute.xlu0 %1241
  %1244 = vset.pattern.permute.xlu0 1
  %1245 = vperm.xlu0 %1244, %v1113
  %v1246 = vpop.permute.xlu0 %1245
  %1248 = vset.pattern.permute.xlu0 1
  %1249 = vperm.xlu0 %1248, %v1118
  %v1250 = vpop.permute.xlu0 %1249
  %1252 = vset.pattern.permute.xlu0 1
  %1253 = vperm.xlu0 %1252, %v1123
  %v1254 = vpop.permute.xlu0 %1253
  %1257 = vset.pattern.permute.xlu0 0
  %1258 = vperm.xlu0 %1257, %v39
  %v1259 = vpop.permute.xlu0 %1258
  %1262 = vset.pattern.permute.xlu0 0
  %1263 = vperm.xlu0 %1262, %v40
  %v1264 = vpop.permute.xlu0 %1263
  %1267 = vset.pattern.permute.xlu0 0
  %1268 = vperm.xlu0 %1267, %v41
  %v1269 = vpop.permute.xlu0 %1268
  %1272 = vset.pattern.permute.xlu0 0
  %1273 = vperm.xlu0 %1272, %v42
  %v1274 = vpop.permute.xlu0 %1273
  %1277 = vset.pattern.permute.xlu0 0
  %1278 = vperm.xlu0 %1277, %v43
  %v1279 = vpop.permute.xlu0 %1278
  %1282 = vset.pattern.permute.xlu0 0
  %1283 = vperm.xlu0 %1282, %v44
  %v1284 = vpop.permute.xlu0 %1283
  %1287 = vset.pattern.permute.xlu0 0
  %1288 = vperm.xlu0 %1287, %v45
  %v1289 = vpop.permute.xlu0 %1288
  %1292 = vset.pattern.permute.xlu0 0
  %1293 = vperm.xlu0 %1292, %v46
  %v1294 = vpop.permute.xlu0 %1293
  %v1297 = vlaneseq
  %v1298 = vshrl.u32 %v1297, 7
  %v1299 = vsub.s32 0, %v1298
  %v1300 = vrot.slane %v1183, %v1299
  %v1301 = vlaneseq
  %v1302 = vshrl.u32 %v1301, 7
  %v1303 = vsub.s32 4, %v1302
  %v1304 = vrot.slane %v1183, %v1303
  %v1307 = vlaneseq
  %v1308 = vshrl.u32 %v1307, 7
  %v1309 = vsub.s32 0, %v1308
  %v1310 = vrot.slane %v1300, %v1309
  %v1311 = vlaneseq
  %v1312 = vshrl.u32 %v1311, 7
  %v1313 = vsub.s32 0, %v1312
  %v1314 = vrot.slane %v1304, %v1313
  %v1315 = vmul.f32 %v1259, %v1310
  %v1316 = vmul.f32 %v1259, %v1314
  %v1317 = vmul.f32 %v1264, %v1310
  %v1318 = vmul.f32 %v1264, %v1314
  %v1319 = vmul.f32 %v1269, %v1310
  %v1320 = vmul.f32 %v1269, %v1314
  %v1321 = vmul.f32 %v1274, %v1310
  %v1322 = vmul.f32 %v1274, %v1314
  %v1323 = vmul.f32 %v1279, %v1310
  %v1324 = vmul.f32 %v1279, %v1314
  %v1325 = vmul.f32 %v1284, %v1310
  %v1326 = vmul.f32 %v1284, %v1314
  %v1327 = vmul.f32 %v1289, %v1310
  %v1328 = vmul.f32 %v1289, %v1314
  %v1329 = vmul.f32 %v1294, %v1310
  %v1330 = vmul.f32 %v1294, %v1314
  %1331 = vset.pattern.permute.xlu0 1
  %1332 = vperm.xlu0 %1331, %v39
  %v1333 = vpop.permute.xlu0 %1332
  %1335 = vset.pattern.permute.xlu0 1
  %1336 = vperm.xlu0 %1335, %v40
  %v1337 = vpop.permute.xlu0 %1336
  %1339 = vset.pattern.permute.xlu0 1
  %1340 = vperm.xlu0 %1339, %v41
  %v1341 = vpop.permute.xlu0 %1340
  %1343 = vset.pattern.permute.xlu0 1
  %1344 = vperm.xlu0 %1343, %v42
  %v1345 = vpop.permute.xlu0 %1344
  %1347 = vset.pattern.permute.xlu0 1
  %1348 = vperm.xlu0 %1347, %v43
  %v1349 = vpop.permute.xlu0 %1348
  %1351 = vset.pattern.permute.xlu0 1
  %1352 = vperm.xlu0 %1351, %v44
  %v1353 = vpop.permute.xlu0 %1352
  %1355 = vset.pattern.permute.xlu0 1
  %1356 = vperm.xlu0 %1355, %v45
  %v1357 = vpop.permute.xlu0 %1356
  %1359 = vset.pattern.permute.xlu0 1
  %1360 = vperm.xlu0 %1359, %v46
  %v1361 = vpop.permute.xlu0 %1360
  %v1363 = vlaneseq
  %v1364 = vshrl.u32 %v1363, 7
  %v1365 = vsub.s32 1, %v1364
  %v1366 = vrot.slane %v1183, %v1365
  %v1367 = vlaneseq
  %v1368 = vshrl.u32 %v1367, 7
  %v1369 = vsub.s32 5, %v1368
  %v1370 = vrot.slane %v1183, %v1369
  %v1373 = vlaneseq
  %v1374 = vshrl.u32 %v1373, 7
  %v1375 = vsub.s32 1, %v1374
  %v1376 = vrot.slane %v1366, %v1375
  %v1377 = vlaneseq
  %v1378 = vshrl.u32 %v1377, 7
  %v1379 = vsub.s32 1, %v1378
  %v1380 = vrot.slane %v1370, %v1379
  %v1381 = vmul.f32 %v1333, %v1376
  %v1382 = vmul.f32 %v1333, %v1380
  %v1383 = vmul.f32 %v1337, %v1376
  %v1384 = vmul.f32 %v1337, %v1380
  %v1385 = vmul.f32 %v1341, %v1376
  %v1386 = vmul.f32 %v1341, %v1380
  %v1387 = vmul.f32 %v1345, %v1376
  %v1388 = vmul.f32 %v1345, %v1380
  %v1389 = vmul.f32 %v1349, %v1376
  %v1390 = vmul.f32 %v1349, %v1380
  %v1391 = vmul.f32 %v1353, %v1376
  %v1392 = vmul.f32 %v1353, %v1380
  %v1393 = vmul.f32 %v1357, %v1376
  %v1394 = vmul.f32 %v1357, %v1380
  %v1395 = vmul.f32 %v1361, %v1376
  %v1396 = vmul.f32 %v1361, %v1380
  %v1397 = vadd.f32 %v1315, %v1381
  %v1398 = vadd.f32 %v1316, %v1382
  %v1399 = vadd.f32 %v1317, %v1383
  %v1400 = vadd.f32 %v1318, %v1384
  %v1401 = vadd.f32 %v1319, %v1385
  %v1402 = vadd.f32 %v1320, %v1386
  %v1403 = vadd.f32 %v1321, %v1387
  %v1404 = vadd.f32 %v1322, %v1388
  %v1405 = vadd.f32 %v1323, %v1389
  %v1406 = vadd.f32 %v1324, %v1390
  %v1407 = vadd.f32 %v1325, %v1391
  %v1408 = vadd.f32 %v1326, %v1392
  %v1409 = vadd.f32 %v1327, %v1393
  %v1410 = vadd.f32 %v1328, %v1394
  %v1411 = vadd.f32 %v1329, %v1395
  %v1412 = vadd.f32 %v1330, %v1396
  %1413 = vset.pattern.permute.xlu0 2
  %1414 = vperm.xlu0 %1413, %v39
  %v1415 = vpop.permute.xlu0 %1414
  %1417 = vset.pattern.permute.xlu0 2
  %1418 = vperm.xlu0 %1417, %v40
  %v1419 = vpop.permute.xlu0 %1418
  %1421 = vset.pattern.permute.xlu0 2
  %1422 = vperm.xlu0 %1421, %v41
  %v1423 = vpop.permute.xlu0 %1422
  %1425 = vset.pattern.permute.xlu0 2
  %1426 = vperm.xlu0 %1425, %v42
  %v1427 = vpop.permute.xlu0 %1426
  %1429 = vset.pattern.permute.xlu0 2
  %1430 = vperm.xlu0 %1429, %v43
  %v1431 = vpop.permute.xlu0 %1430
  %1433 = vset.pattern.permute.xlu0 2
  %1434 = vperm.xlu0 %1433, %v44
  %v1435 = vpop.permute.xlu0 %1434
  %1437 = vset.pattern.permute.xlu0 2
  %1438 = vperm.xlu0 %1437, %v45
  %v1439 = vpop.permute.xlu0 %1438
  %1441 = vset.pattern.permute.xlu0 2
  %1442 = vperm.xlu0 %1441, %v46
  %v1443 = vpop.permute.xlu0 %1442
  %v1445 = vlaneseq
  %v1446 = vshrl.u32 %v1445, 7
  %v1447 = vsub.s32 2, %v1446
  %v1448 = vrot.slane %v1183, %v1447
  %v1449 = vlaneseq
  %v1450 = vshrl.u32 %v1449, 7
  %v1451 = vsub.s32 6, %v1450
  %v1452 = vrot.slane %v1183, %v1451
  %v1455 = vlaneseq
  %v1456 = vshrl.u32 %v1455, 7
  %v1457 = vsub.s32 2, %v1456
  %v1458 = vrot.slane %v1448, %v1457
  %v1459 = vlaneseq
  %v1460 = vshrl.u32 %v1459, 7
  %v1461 = vsub.s32 2, %v1460
  %v1462 = vrot.slane %v1452, %v1461
  %v1463 = vmul.f32 %v1415, %v1458
  %v1464 = vmul.f32 %v1415, %v1462
  %v1465 = vmul.f32 %v1419, %v1458
  %v1466 = vmul.f32 %v1419, %v1462
  %v1467 = vmul.f32 %v1423, %v1458
  %v1468 = vmul.f32 %v1423, %v1462
  %v1469 = vmul.f32 %v1427, %v1458
  %v1470 = vmul.f32 %v1427, %v1462
  %v1471 = vmul.f32 %v1431, %v1458
  %v1472 = vmul.f32 %v1431, %v1462
  %v1473 = vmul.f32 %v1435, %v1458
  %v1474 = vmul.f32 %v1435, %v1462
  %v1475 = vmul.f32 %v1439, %v1458
  %v1476 = vmul.f32 %v1439, %v1462
  %v1477 = vmul.f32 %v1443, %v1458
  %v1478 = vmul.f32 %v1443, %v1462
  %v1479 = vadd.f32 %v1397, %v1463
  %v1480 = vadd.f32 %v1398, %v1464
  %v1481 = vadd.f32 %v1399, %v1465
  %v1482 = vadd.f32 %v1400, %v1466
  %v1483 = vadd.f32 %v1401, %v1467
  %v1484 = vadd.f32 %v1402, %v1468
  %v1485 = vadd.f32 %v1403, %v1469
  %v1486 = vadd.f32 %v1404, %v1470
  %v1487 = vadd.f32 %v1405, %v1471
  %v1488 = vadd.f32 %v1406, %v1472
  %v1489 = vadd.f32 %v1407, %v1473
  %v1490 = vadd.f32 %v1408, %v1474
  %v1491 = vadd.f32 %v1409, %v1475
  %v1492 = vadd.f32 %v1410, %v1476
  %v1493 = vadd.f32 %v1411, %v1477
  %v1494 = vadd.f32 %v1412, %v1478
  %v1495 = vadd.f32 %v1479, %v1187
  %v1496 = vadd.f32 %v1480, %v1226
  %v1497 = vadd.f32 %v1481, %v1192
  %v1498 = vadd.f32 %v1482, %v1230
  %v1499 = vadd.f32 %v1483, %v1197
  %v1500 = vadd.f32 %v1484, %v1234
  %v1501 = vadd.f32 %v1485, %v1202
  %v1502 = vadd.f32 %v1486, %v1238
  %v1503 = vadd.f32 %v1487, %v1207
  %v1504 = vadd.f32 %v1488, %v1242
  %v1505 = vadd.f32 %v1489, %v1212
  %v1506 = vadd.f32 %v1490, %v1246
  %v1507 = vadd.f32 %v1491, %v1217
  %v1508 = vadd.f32 %v1492, %v1250
  %v1509 = vadd.f32 %v1493, %v1222
  %v1510 = vadd.f32 %v1494, %v1254
  %v1511 = vmax.f32 %v1495, 0.0
  %v1512 = vmax.f32 %v1496, 0.0
  %v1513 = vmax.f32 %v1497, 0.0
  %v1514 = vmax.f32 %v1498, 0.0
  %v1515 = vmax.f32 %v1499, 0.0
  %v1516 = vmax.f32 %v1500, 0.0
  %v1517 = vmax.f32 %v1501, 0.0
  %v1518 = vmax.f32 %v1502, 0.0
  %v1519 = vmax.f32 %v1503, 0.0
  %v1520 = vmax.f32 %v1504, 0.0
  %v1521 = vmax.f32 %v1505, 0.0
  %v1522 = vmax.f32 %v1506, 0.0
  %v1523 = vmax.f32 %v1507, 0.0
  %v1524 = vmax.f32 %v1508, 0.0
  %v1525 = vmax.f32 %v1509, 0.0
  %v1526 = vmax.f32 %v1510, 0.0
  %v1527 = vld [vmem:[%s4 + $0x90] sm:$0x7]
  %1529 = vset.pattern.permute.xlu0 0
  %1530 = vperm.xlu0 %1529, %v77
  %v1531 = vpop.permute.xlu0 %1530
  %v1534 = vsel %vm726, %v1527, 0
  %1536 = vmatprep.subr.mxu0 %v1512
  %1537 = vmatpush1.msra.mxu0 %v1511
  %1538 = vmatprep.subr.mxu0 %v1514
  %1539 = vmatpush1.msra.mxu0 %v1513
  %1540 = vmatprep.subr.mxu0 %v1516
  %1541 = vmatpush1.msra.mxu0 %v1515
  %1542 = vmatprep.subr.mxu0 %v1518
  %1543 = vmatpush1.msra.mxu0 %v1517
  %1544 = vmatprep.subr.mxu0 %v1520
  %1545 = vmatpush1.msra.mxu0 %v1519
  %1546 = vmatprep.subr.mxu0 %v1522
  %1547 = vmatpush1.msra.mxu0 %v1521
  %1548 = vmatprep.subr.mxu0 %v1524
  %1549 = vmatpush1.msra.mxu0 %v1523
  %1550 = vmatprep.subr.mxu0 %v1526
  %1551 = vmatpush1.msra.mxu0 %v1525
  %1552 = vmatprep.subr.mxu0 0.0
  %1553 = vmatpush1.msra.mxu0 0.0
  %1554 = vmatprep.subr.mxu0 0.0
  %1555 = vmatpush1.msra.mxu0 0.0
  %1556 = vmatprep.subr.mxu0 0.0
  %1557 = vmatpush1.msra.mxu0 0.0
  %1558 = vmatprep.subr.mxu0 0.0
  %1559 = vmatpush1.msra.mxu0 0.0
  %1560 = vmatprep.subr.mxu0 0.0
  %1561 = vmatpush1.msra.mxu0 0.0
  %1562 = vmatprep.subr.mxu0 0.0
  %1563 = vmatpush1.msra.mxu0 0.0
  %1564 = vmatprep.subr.mxu0 0.0
  %1565 = vmatpush1.msra.mxu0 0.0
  %1566 = vmatprep.subr.mxu0 0.0
  %1567 = vmatpush1.msra.mxu0 0.0
  %1568 = vmatprep.subr.mxu0 0.0
  %1569 = vmatpush1.msra.mxu0 0.0
  %1570 = vmatprep.subr.mxu0 0.0
  %1571 = vmatpush1.msra.mxu0 0.0
  %1572 = vmatprep.subr.mxu0 0.0
  %1573 = vmatpush1.msra.mxu0 0.0
  %1574 = vmatprep.subr.mxu0 0.0
  %1575 = vmatpush1.msra.mxu0 0.0
  %1576 = vmatprep.subr.mxu0 0.0
  %1577 = vmatpush1.msra.mxu0 0.0
  %1578 = vmatprep.subr.mxu0 0.0
  %1579 = vmatpush1.msra.mxu0 0.0
  %1580 = vmatprep.subr.mxu0 0.0
  %1581 = vmatpush1.msra.mxu0 0.0
  %1582 = vmatprep.subr.mxu0 0.0
  %1583 = vmatpush1.msra.mxu0 0.0
  %1584 = vmatprep.subr.mxu0 0.0
  %1585 = vmatpush1.msra.mxu0 0.0
  %1586 = vmatprep.subr.mxu0 0.0
  %1587 = vmatpush1.msra.mxu0 0.0
  %1588 = vmatprep.subr.mxu0 0.0
  %1589 = vmatpush1.msra.mxu0 0.0
  %1590 = vmatprep.subr.mxu0 0.0
  %1591 = vmatpush1.msra.mxu0 0.0
  %1592 = vmatprep.subr.mxu0 0.0
  %1593 = vmatpush1.msra.mxu0 0.0
  %1594 = vmatprep.subr.mxu0 0.0
  %1595 = vmatpush1.msra.mxu0 0.0
  %1596 = vmatprep.subr.mxu0 0.0
  %1597 = vmatpush1.msra.mxu0 0.0
  %1598 = vmatprep.subr.mxu0 0.0
  %1599 = vmatpush1.msra.mxu0 0.0
  %1600 = vmatprep.mubr.f32.mxu0 0.0
  %1601 = vmatmul.mubr.f32.gmra.mrb[0].mxu0 %v1534
  %v1602 = vpop.f32.mrb[0].mxu0
  %v1603 = vadd.f32 %v1531, %v1602
  %v1604 = vpop.f32.mrb[0].mxu0
  %v1605 = vadd.f32 %v1531, %v1604
  %1606 = vdwg.mxu0
  %v1609 = vcombine.low %v1603, %v1605
  %v1611 = vadd.f32 %v1183, %v1609
  %1612 = vst [vmem:[%s7] sm:$0x77] %v1611
  // Predicated region
  $region26: #{self_sketch_pose_net_forward.3} parent=0 // pred_check
    _
  $region27: #{self_sketch_pose_net_forward.3} parent=0 // pred_check_branch
    %1614 = sbr.rel (0) target = $region29
  $region28: #{self_sketch_pose_net_forward.3} parent=0 // pred_region
    _
  $region29: #{self_sketch_pose_net_forward.3} parent=0 // pred_fallthru
    _
  // Predicated region
  $region30: #{self_sketch_pose_net_forward.3} parent=0 // pred_check
    _
  $region31: #{self_sketch_pose_net_forward.3} parent=0 // pred_check_branch
    %1616 = sbr.rel (0) target = $region33
  $region32: #{self_sketch_pose_net_forward.3} parent=0 // pred_region
    _
  $region33: #{self_sketch_pose_net_forward.3} parent=0 // pred_fallthru
    _
  // Predicated region
  $region34: #{self_sketch_pose_net_forward.3} parent=0 // pred_check
    _
  $region35: #{self_sketch_pose_net_forward.3} parent=0 // pred_check_branch
    %1618 = sbr.rel (0) target = $region37
  $region36: #{self_sketch_pose_net_forward.3} parent=0 // pred_region
    _
  $region37: #{self_sketch_pose_net_forward.3} parent=0 // pred_fallthru
    _
  // Predicated region
  $region38: #{self_sketch_pose_net_forward.3} parent=0 // pred_check
    _
  $region39: #{self_sketch_pose_net_forward.3} parent=0 // pred_check_branch
    %1620 = sbr.rel (0) target = $region41
  $region40: #{self_sketch_pose_net_forward.3} parent=0 // pred_region
    _
  $region41: #{self_sketch_pose_net_forward.3} parent=0 // pred_fallthru
    _

</llo_original>
